<compile_context>
chip_gen: v6e
topology: v6e:2x2x1
jax: 0.10.0
libtpu: 0.0.40
codegen_flags: <defaults>
</compile_context>

<pallas_src>
import functools

import jax
import jax.numpy as jnp
from jax.experimental import pallas as pl
from jax.experimental.pallas import tpu as pltpu


# ---------------------------------------------------------------------------
# In-kernel helpers
# ---------------------------------------------------------------------------
def _snake(h, alpha, beta_inv):
    """SnakeBeta (alpha_logscale=True, folded on host): h + (1/(beta+eps))*sin(alpha*h)^2."""
    s = jnp.sin(h * alpha)
    return h + beta_inv * (s * s)


def _ss_encoder_block_kernel(causal, ksizes, stride, c, t_out,
                             x_ref, vecs_ref, wu_ref, wout_ref, g_ref, o_ref):
    n_units = len(ksizes)
    max_k = max(ksizes)
    t_len = x_ref.shape[-1]

    # TODO(synk): the real module wraps SnakeBeta in Activation1d (anti-aliased 2x
    # up/down-sampling); that filter is not defined in the provided spec, so SnakeBeta
    # is applied pointwise here (matches the given reference).
    h = x_ref[...].astype(jnp.float32)                          # (C, T)
    # Hoisted once per grid step (JAX does not CSE broadcast_in_dim).
    col = jax.lax.broadcasted_iota(jnp.int32, (c, t_len), 1)
    vecs = vecs_ref[...]                                        # (C, 6*n_units + 2)

    def shift(z, off):
        # y[:, t] = z[:, t + off]; zeros outside [0, T). `off` is a static int.
        if off == 0:
            return z
        rolled = pltpu.roll(z, shift=(-off) % t_len, axis=1)
        mask = (col < t_len - off) if off > 0 else (col >= -off)
        return jnp.where(mask, rolled, 0.0)

    for u in range(n_units):
        ks = ksizes[u]
        pad_left = (ks - 1) if causal else (ks - 1) // 2
        v0 = 6 * u
        a1, bi1, b1 = vecs[:, v0:v0 + 1], vecs[:, v0 + 1:v0 + 2], vecs[:, v0 + 2:v0 + 3]
        a2, bi2, bf = vecs[:, v0 + 3:v0 + 4], vecs[:, v0 + 4:v0 + 5], vecs[:, v0 + 5:v0 + 6]
        wu = wu_ref[u]                       # (C, max_k*C + C)
        w1 = wu[:, :ks * c]                  # (C, ks*C)  im2col'd k-tap weight
        wf = wu[:, max_k * c:]               # (C, C)     fused (4C->C)@(C->4C) 1x1 weight

        r = _snake(h, a1, bi1)
        stacked = jnp.concatenate([shift(r, k - pad_left) for k in range(ks)], axis=0)
        r = jnp.dot(w1, stacked, preferred_element_type=jnp.float32) + b1   # k-tap conv
        r = _snake(r, a2, bi2)
        r = jnp.dot(wf, r, preferred_element_type=jnp.float32) + bf         # fused 1x1 pair
        h = h + r                                                            # residual

    af = vecs[:, 6 * n_units:6 * n_units + 1]
    bif = vecs[:, 6 * n_units + 1:6 * n_units + 2]
    h = _snake(h, af, bif)

    wout = wout_ref[...]                     # (Cout, stride*C + 1): [weight | bias]
    w_out = wout[:, :stride * c]
    b_out = wout[:, stride * c:]
    if stride == 1:
        gathered = h                                                         # (C, T_out)
    else:
        # Host-built 0/1 gather: hg[:, k*T_out + to] == h[:, to*stride + k].
        hg = jnp.dot(h, g_ref[...], preferred_element_type=jnp.float32)     # (C, s*T_out)
        gathered = jnp.concatenate(
            [hg[:, k * t_out:(k + 1) * t_out] for k in range(stride)], axis=0)  # (s*C, T_out)
    y = jnp.dot(w_out, gathered, preferred_element_type=jnp.float32) + b_out
    o_ref[...] = y.astype(o_ref.dtype)


# ---------------------------------------------------------------------------
# Host-side parameter preparation (weight-norm, log-scale snake, 1x1 fold, im2col)
# ---------------------------------------------------------------------------
def _weight_norm(v, g):
    """PyTorch weight_norm (dim=0): w = g * v / ||v||, norm over (in, kernel)."""
    norm = jnp.sqrt(jnp.sum(v * v, axis=(1, 2), keepdims=True))
    return g.reshape(-1, 1, 1) * v / norm


def _snake_vectors(alpha_log, beta_log):
    a = jnp.exp(alpha_log).astype(jnp.float32)
    binv = (1.0 / (jnp.exp(beta_log) + 1e-9)).astype(jnp.float32)
    return a, binv


def _tap_major(w):
    """(Cout, Cin, K) -> (Cout, K*Cin) with column index k*Cin + ci (matches im2col rows)."""
    cout, cin, k = w.shape
    return jnp.transpose(w, (0, 2, 1)).reshape(cout, k * cin)


def ss_encoder_block(x, params, *, causal=False):
    """Fused SSEncoderBlock forward. x: (B, dim//2, T) -> (B, dim, T//stride)."""
    B, C, T = x.shape
    n_units = len(params["units"])
    ksizes = tuple(int(u["conv1_v"].shape[-1]) for u in params["units"])
    for ks in ksizes:
        # 'same' padding (k-1)//2 only reproduces length-T output for odd k (non-causal).
        assert causal or ks % 2 == 1, "non-causal 'same' conv requires odd kernel size"
    max_k = max(ksizes)

    vec_cols, wu_blocks = [], []
    for unit, ks in zip(params["units"], ksizes):
        a1, bi1 = _snake_vectors(unit["snake1_alpha"], unit["snake1_beta"])
        a2, bi2 = _snake_vectors(unit["snake2_alpha"], unit["snake2_beta"])
        w1 = _tap_major(_weight_norm(unit["conv1_v"], unit["conv1_g"])).astype(jnp.float32)
        b1 = unit["conv1_b"].astype(jnp.float32)
        w2 = _weight_norm(unit["conv2_v"], unit["conv2_g"])[:, :, 0]     # (4C, C)
        w3 = _weight_norm(unit["conv3_v"], unit["conv3_g"])[:, :, 0]     # (C, 4C)
        wf = (w3 @ w2).astype(jnp.float32)                               # exact 1x1 fold
        bf = (w3 @ unit["conv2_b"] + unit["conv3_b"]).astype(jnp.float32)
        vec_cols += [a1, bi1, b1, a2, bi2, bf]
        pad = jnp.zeros((C, (max_k - ks) * C), jnp.float32)
        wu_blocks.append(jnp.concatenate([w1, pad, wf], axis=1))
    af, bif = _snake_vectors(params["snake_alpha"], params["snake_beta"])
    vec_cols += [af, bif]

    vecs = jnp.stack(vec_cols, axis=1).astype(jnp.float32)      # (C, 6*n_units + 2)
    wu_pack = jnp.stack(wu_blocks, axis=0)                      # (n_units, C, max_k*C + C)

    w_out = _weight_norm(params["conv_out_v"], params["conv_out_g"])     # (Cout, C, s)
    c_out, _, stride = w_out.shape
    assert T % stride == 0, "sequence length must be divisible by stride"
    t_out = T // stride
    wout_pack = jnp.concatenate(
        [_tap_major(w_out), params["conv_out_b"].reshape(-1, 1)], axis=1
    ).astype(jnp.float32)                                       # (Cout, s*C + 1)

    # Gather matrix for the strided conv: (h @ G)[:, k*t_out + to] = h[:, to*stride + k].
    if stride == 1:
        gmat = jnp.eye(T, dtype=jnp.float32)    # unused by the kernel when stride == 1
    else:
        t_idx = jnp.arange(T, dtype=jnp.int32)[:, None]
        cols = jnp.arange(stride * t_out, dtype=jnp.int32)[None, :]
        gmat = (t_idx == (cols % t_out) * stride + cols // t_out).astype(jnp.float32)

    kernel = functools.partial(_ss_encoder_block_kernel, causal, ksizes, stride, C, t_out)
    in_specs = [
        pl.BlockSpec((None, C, T), lambda b: (b, 0, 0)),
        pl.BlockSpec(vecs.shape, lambda b: (0, 0)),
        pl.BlockSpec(wu_pack.shape, lambda b: (0, 0, 0)),
        pl.BlockSpec(wout_pack.shape, lambda b: (0, 0)),
        pl.BlockSpec(gmat.shape, lambda b: (0, 0)),
    ]
    out_spec = pl.BlockSpec((None, c_out, t_out), lambda b: (b, 0, 0))
    return pl.pallas_call(
        kernel,
        out_shape=jax.ShapeDtypeStruct((B, c_out, t_out), x.dtype),
        grid=(B,),
        in_specs=in_specs,
        out_specs=out_spec,
        compiler_params=pltpu.CompilerParams(
            dimension_semantics=("parallel",),
            vmem_limit_bytes=32 * 1024 * 1024,
        ),
    )(x, vecs, wu_pack, wout_pack, gmat)


# ---------------------------------------------------------------------------
# Parameter init (PyTorch-like defaults, deterministically perturbed) + JAX reference
# ---------------------------------------------------------------------------
def init_ss_encoder_block_params(key, dim=16, stride=1, kernel_sizes=(3, 3)):
    c = dim // 2

    def conv_params(k, cout, cin, ksize):
        kv, kg, kb = jax.random.split(k, 3)
        bound = 1.0 / (cin * ksize) ** 0.5
        v = jax.random.uniform(kv, (cout, cin, ksize), jnp.float32, -bound, bound)
        g = jnp.sqrt(jnp.sum(v * v, axis=(1, 2)))               # weight_norm init: g = ||v||
        g = g * (1.0 + 0.1 * jax.random.normal(kg, (cout,), jnp.float32))
        b = jax.random.uniform(kb, (cout,), jnp.float32, -bound, bound)
        return v, g, b

    def snake_params(k, ch):
        ka, kb = jax.random.split(k)
        return (0.1 * jax.random.normal(ka, (ch,), jnp.float32),
                0.1 * jax.random.normal(kb, (ch,), jnp.float32))

    keys = jax.random.split(key, len(kernel_sizes) + 1)
    units = []
    for i, ksize in enumerate(kernel_sizes):
        uk = jax.random.split(keys[i], 5)
        s1a, s1b = snake_params(uk[0], c)
        v1, g1, b1 = conv_params(uk[1], c, c, ksize)
        s2a, s2b = snake_params(uk[2], c)
        v2, g2, b2 = conv_params(uk[3], 4 * c, c, 1)
        v3, g3, b3 = conv_params(uk[4], c, 4 * c, 1)
        units.append(dict(
            snake1_alpha=s1a, snake1_beta=s1b, conv1_v=v1, conv1_g=g1, conv1_b=b1,
            snake2_alpha=s2a, snake2_beta=s2b, conv2_v=v2, conv2_g=g2, conv2_b=b2,
            conv3_v=v3, conv3_g=g3, conv3_b=b3))
    fk = jax.random.split(keys[-1], 2)
    sfa, sfb = snake_params(fk[0], c)
    vo, go, bo = conv_params(fk[1], dim, c, stride)
    return dict(units=units, snake_alpha=sfa, snake_beta=sfb,
                conv_out_v=vo, conv_out_g=go, conv_out_b=bo)


def ss_encoder_block_ref(x, params, *, causal=False):
    """Pure-JAX (XLA) reference with the un-fused per-layer math."""
    def snake(h, alpha_log, beta_log):
        a = jnp.exp(alpha_log)[None, :, None]
        binv = 1.0 / (jnp.exp(beta_log)[None, :, None] + 1e-9)
        return h + binv * jnp.sin(h * a) ** 2

    def conv(h, v, g, bias, pad_l, pad_r, stride=1):
        w = _weight_norm(v, g)
        hp = jnp.pad(h, ((0, 0), (0, 0), (pad_l, pad_r)))
        y = jax.lax.conv_general_dilated(
            hp, w, window_strides=(stride,), padding="VALID",
            dimension_numbers=("NCH", "OIH", "NCH"),
            precision=jax.lax.Precision.HIGHEST)
        return y + bias[None, :, None]

    h = x
    for unit in params["units"]:
        ks = unit["conv1_v"].shape[-1]
        pad_l = ks - 1 if causal else (ks - 1) // 2
        pad_r = 0 if causal else (ks - 1) // 2
        r = snake(h, unit["snake1_alpha"], unit["snake1_beta"])
        r = conv(r, unit["conv1_v"], unit["conv1_g"], unit["conv1_b"], pad_l, pad_r)
        r = snake(r, unit["snake2_alpha"], unit["snake2_beta"])
        r = conv(r, unit["conv2_v"], unit["conv2_g"], unit["conv2_b"], 0, 0)
        r = conv(r, unit["conv3_v"], unit["conv3_g"], unit["conv3_b"], 0, 0)
        h = h + r
    h = snake(h, params["snake_alpha"], params["snake_beta"])
    s = params["conv_out_v"].shape[-1]
    return conv(h, params["conv_out_v"], params["conv_out_g"], params["conv_out_b"],
                0, 0, stride=s)


if __name__ == "__main__":
    # Small shapes implied by the module: dim=16 -> 8 channels in, 16 out.
    # T=256 with stride=2 keeps both input (256) and output (128) lane-dense.
    B, dim, T = 2, 16, 256
    stride = 2
    kernel_sizes = (3, 3)
    causal = False

    key = jax.random.PRNGKey(0)
    kx, kp = jax.random.split(key)
    x = jax.random.normal(kx, (B, dim // 2, T), dtype=jnp.float32)
    params = init_ss_encoder_block_params(kp, dim=dim, stride=stride,
                                          kernel_sizes=kernel_sizes)

    fwd = jax.jit(ss_encoder_block, static_argnames=("causal",))
    y = jax.block_until_ready(fwd(x, params, causal=causal))

    y_ref = ss_encoder_block_ref(x, params, causal=causal)
    assert y.shape == (B, dim, T // stride) and y.dtype == x.dtype
    max_err = float(jnp.max(jnp.abs(y - y_ref)))
    # All-f32 path with f32 MXU accumulation: typical error ~1e-5; 5e-3 is tight enough
    # that any tap/shift/fold structural bug (O(0.1)+) cannot hide.
    assert jnp.allclose(y, y_ref, atol=5e-3, rtol=5e-3), f"max abs err {max_err}"

    print("KERNEL_OK")
</pallas_src>

<mosaic_0001>
module attributes {stable_mosaic.version = 11 : i64} {
  func.func @_ss_encoder_block_kernel(%arg0: i32, %arg1: memref<1x8x256xf32, #tpu.memory_space<vmem>>, %arg2: memref<8x14xf32, #tpu.memory_space<vmem>>, %arg3: memref<2x8x32xf32, #tpu.memory_space<vmem>>, %arg4: memref<16x17xf32, #tpu.memory_space<vmem>>, %arg5: memref<256x256xf32, #tpu.memory_space<vmem>>, %arg6: memref<1x16x128xf32, #tpu.memory_space<vmem>>) attributes {dimension_semantics = [#tpu.dimension_semantics<parallel>], iteration_bounds = array<i64: 2>, scalar_prefetch = 0 : i64, scratch_operands = 0 : i64, tpu.core_type = #tpu.core_type<tc>, window_params = [{transform_indices = @transform_0, window_bounds = array<i64: 1, 8, 256>}, {pipeline_mode = #tpu.pipeline_mode<synchronous>, transform_indices = @transform_1, window_bounds = array<i64: 8, 14>}, {pipeline_mode = #tpu.pipeline_mode<synchronous>, transform_indices = @transform_2, window_bounds = array<i64: 2, 8, 32>}, {pipeline_mode = #tpu.pipeline_mode<synchronous>, transform_indices = @transform_3, window_bounds = array<i64: 16, 17>}, {pipeline_mode = #tpu.pipeline_mode<synchronous>, transform_indices = @transform_4, window_bounds = array<i64: 256, 256>}, {transform_indices = @transform_5, window_bounds = array<i64: 1, 16, 128>}]} {
    %c0 = arith.constant 0 : index
    %c0_0 = arith.constant 0 : index
    %c0_1 = arith.constant 0 : index
    %0 = vector.load %arg1[%c0, %c0_0, %c0_1] : memref<1x8x256xf32, #tpu.memory_space<vmem>>, vector<1x8x256xf32>
    %1 = vector.shape_cast %0 : vector<1x8x256xf32> to vector<8x256xf32>
    %2 = tpu.iota {dimensions = array<i32: 1>} : vector<8x256xi32>
    %c0_2 = arith.constant 0 : index
    %c0_3 = arith.constant 0 : index
    %3 = vector.load %arg2[%c0_2, %c0_3] : memref<8x14xf32, #tpu.memory_space<vmem>>, vector<8x14xf32>
    %4 = vector.extract_strided_slice %3 {offsets = [0, 0], sizes = [8, 1], strides = [1, 1]} : vector<8x14xf32> to vector<8x1xf32>
    %5 = vector.extract_strided_slice %3 {offsets = [0, 1], sizes = [8, 1], strides = [1, 1]} : vector<8x14xf32> to vector<8x1xf32>
    %6 = vector.extract_strided_slice %3 {offsets = [0, 2], sizes = [8, 1], strides = [1, 1]} : vector<8x14xf32> to vector<8x1xf32>
    %7 = vector.extract_strided_slice %3 {offsets = [0, 3], sizes = [8, 1], strides = [1, 1]} : vector<8x14xf32> to vector<8x1xf32>
    %8 = vector.extract_strided_slice %3 {offsets = [0, 4], sizes = [8, 1], strides = [1, 1]} : vector<8x14xf32> to vector<8x1xf32>
    %9 = vector.extract_strided_slice %3 {offsets = [0, 5], sizes = [8, 1], strides = [1, 1]} : vector<8x14xf32> to vector<8x1xf32>
    %c0_4 = arith.constant 0 : index
    %c0_5 = arith.constant 0 : index
    %c0_6 = arith.constant 0 : index
    %10 = vector.load %arg3[%c0_4, %c0_5, %c0_6] : memref<2x8x32xf32, #tpu.memory_space<vmem>>, vector<1x8x32xf32>
    %11 = vector.shape_cast %10 : vector<1x8x32xf32> to vector<8x32xf32>
    %12 = vector.extract_strided_slice %11 {offsets = [0, 0], sizes = [8, 24], strides = [1, 1]} : vector<8x32xf32> to vector<8x24xf32>
    %13 = vector.extract_strided_slice %11 {offsets = [0, 24], sizes = [8, 8], strides = [1, 1]} : vector<8x32xf32> to vector<8x8xf32>
    %14 = vector.broadcast %4 : vector<8x1xf32> to vector<8x256xf32>
    %15 = arith.mulf %1, %14 : vector<8x256xf32>
    %16 = math.sin %15 : vector<8x256xf32>
    %17 = arith.mulf %16, %16 : vector<8x256xf32>
    %18 = vector.broadcast %5 : vector<8x1xf32> to vector<8x256xf32>
    %19 = arith.mulf %18, %17 : vector<8x256xf32>
    %20 = arith.addf %1, %19 : vector<8x256xf32>
    %c1_i32 = arith.constant 1 : i32
    %21 = tpu.dynamic_rotate %20 by %c1_i32 dim 1 : vector<8x256xf32>, i32 -> vector<8x256xf32>
    %c1_i32_7 = arith.constant 1 : i32
    %22 = vector.broadcast %c1_i32_7 : i32 to vector<8x256xi32>
    %23 = arith.cmpi sge, %2, %22 : vector<8x256xi32>
    %cst = arith.constant 0.000000e+00 : f32
    %24 = vector.broadcast %cst : f32 to vector<8x256xf32>
    %25 = arith.select %23, %21, %24 : vector<8x256xi1>, vector<8x256xf32>
    %c255_i32 = arith.constant 255 : i32
    %26 = tpu.dynamic_rotate %20 by %c255_i32 dim 1 : vector<8x256xf32>, i32 -> vector<8x256xf32>
    %c255_i32_8 = arith.constant 255 : i32
    %27 = vector.broadcast %c255_i32_8 : i32 to vector<8x256xi32>
    %28 = arith.cmpi slt, %2, %27 : vector<8x256xi32>
    %cst_9 = arith.constant 0.000000e+00 : f32
    %29 = vector.broadcast %cst_9 : f32 to vector<8x256xf32>
    %30 = arith.select %28, %26, %29 : vector<8x256xi1>, vector<8x256xf32>
    %31 = tpu.concatenate %25, %20, %30 in 0 : vector<8x256xf32>, vector<8x256xf32>, vector<8x256xf32> -> vector<24x256xf32>
    %cst_10 = arith.constant dense<0.000000e+00> : vector<8x256xf32>
    %32 = tpu.matmul %12, %31, %cst_10 {dimension_numbers = #tpu.dot_dimension_numbers<[1], [0], [0], [1], [0, 0, 1, 1], [], []>} : vector<8x24xf32>, vector<24x256xf32>, vector<8x256xf32> -> vector<8x256xf32>
    %33 = vector.broadcast %6 : vector<8x1xf32> to vector<8x256xf32>
    %34 = arith.addf %32, %33 : vector<8x256xf32>
    %35 = vector.broadcast %7 : vector<8x1xf32> to vector<8x256xf32>
    %36 = arith.mulf %34, %35 : vector<8x256xf32>
    %37 = math.sin %36 : vector<8x256xf32>
    %38 = arith.mulf %37, %37 : vector<8x256xf32>
    %39 = vector.broadcast %8 : vector<8x1xf32> to vector<8x256xf32>
    %40 = arith.mulf %39, %38 : vector<8x256xf32>
    %41 = arith.addf %34, %40 : vector<8x256xf32>
    %cst_11 = arith.constant dense<0.000000e+00> : vector<8x256xf32>
    %42 = tpu.matmul %13, %41, %cst_11 {dimension_numbers = #tpu.dot_dimension_numbers<[1], [0], [0], [1], [0, 0, 1, 1], [], []>} : vector<8x8xf32>, vector<8x256xf32>, vector<8x256xf32> -> vector<8x256xf32>
    %43 = vector.broadcast %9 : vector<8x1xf32> to vector<8x256xf32>
    %44 = arith.addf %42, %43 : vector<8x256xf32>
    %45 = arith.addf %1, %44 : vector<8x256xf32>
    %46 = vector.extract_strided_slice %3 {offsets = [0, 6], sizes = [8, 1], strides = [1, 1]} : vector<8x14xf32> to vector<8x1xf32>
    %47 = vector.extract_strided_slice %3 {offsets = [0, 7], sizes = [8, 1], strides = [1, 1]} : vector<8x14xf32> to vector<8x1xf32>
    %48 = vector.extract_strided_slice %3 {offsets = [0, 8], sizes = [8, 1], strides = [1, 1]} : vector<8x14xf32> to vector<8x1xf32>
    %49 = vector.extract_strided_slice %3 {offsets = [0, 9], sizes = [8, 1], strides = [1, 1]} : vector<8x14xf32> to vector<8x1xf32>
    %50 = vector.extract_strided_slice %3 {offsets = [0, 10], sizes = [8, 1], strides = [1, 1]} : vector<8x14xf32> to vector<8x1xf32>
    %51 = vector.extract_strided_slice %3 {offsets = [0, 11], sizes = [8, 1], strides = [1, 1]} : vector<8x14xf32> to vector<8x1xf32>
    %c1 = arith.constant 1 : index
    %c0_12 = arith.constant 0 : index
    %c0_13 = arith.constant 0 : index
    %52 = vector.load %arg3[%c1, %c0_12, %c0_13] : memref<2x8x32xf32, #tpu.memory_space<vmem>>, vector<1x8x32xf32>
    %53 = vector.shape_cast %52 : vector<1x8x32xf32> to vector<8x32xf32>
    %54 = vector.extract_strided_slice %53 {offsets = [0, 0], sizes = [8, 24], strides = [1, 1]} : vector<8x32xf32> to vector<8x24xf32>
    %55 = vector.extract_strided_slice %53 {offsets = [0, 24], sizes = [8, 8], strides = [1, 1]} : vector<8x32xf32> to vector<8x8xf32>
    %56 = vector.broadcast %46 : vector<8x1xf32> to vector<8x256xf32>
    %57 = arith.mulf %45, %56 : vector<8x256xf32>
    %58 = math.sin %57 : vector<8x256xf32>
    %59 = arith.mulf %58, %58 : vector<8x256xf32>
    %60 = vector.broadcast %47 : vector<8x1xf32> to vector<8x256xf32>
    %61 = arith.mulf %60, %59 : vector<8x256xf32>
    %62 = arith.addf %45, %61 : vector<8x256xf32>
    %c1_i32_14 = arith.constant 1 : i32
    %63 = tpu.dynamic_rotate %62 by %c1_i32_14 dim 1 : vector<8x256xf32>, i32 -> vector<8x256xf32>
    %c1_i32_15 = arith.constant 1 : i32
    %64 = vector.broadcast %c1_i32_15 : i32 to vector<8x256xi32>
    %65 = arith.cmpi sge, %2, %64 : vector<8x256xi32>
    %cst_16 = arith.constant 0.000000e+00 : f32
    %66 = vector.broadcast %cst_16 : f32 to vector<8x256xf32>
    %67 = arith.select %65, %63, %66 : vector<8x256xi1>, vector<8x256xf32>
    %c255_i32_17 = arith.constant 255 : i32
    %68 = tpu.dynamic_rotate %62 by %c255_i32_17 dim 1 : vector<8x256xf32>, i32 -> vector<8x256xf32>
    %c255_i32_18 = arith.constant 255 : i32
    %69 = vector.broadcast %c255_i32_18 : i32 to vector<8x256xi32>
    %70 = arith.cmpi slt, %2, %69 : vector<8x256xi32>
    %cst_19 = arith.constant 0.000000e+00 : f32
    %71 = vector.broadcast %cst_19 : f32 to vector<8x256xf32>
    %72 = arith.select %70, %68, %71 : vector<8x256xi1>, vector<8x256xf32>
    %73 = tpu.concatenate %67, %62, %72 in 0 : vector<8x256xf32>, vector<8x256xf32>, vector<8x256xf32> -> vector<24x256xf32>
    %cst_20 = arith.constant dense<0.000000e+00> : vector<8x256xf32>
    %74 = tpu.matmul %54, %73, %cst_20 {dimension_numbers = #tpu.dot_dimension_numbers<[1], [0], [0], [1], [0, 0, 1, 1], [], []>} : vector<8x24xf32>, vector<24x256xf32>, vector<8x256xf32> -> vector<8x256xf32>
    %75 = vector.broadcast %48 : vector<8x1xf32> to vector<8x256xf32>
    %76 = arith.addf %74, %75 : vector<8x256xf32>
    %77 = vector.broadcast %49 : vector<8x1xf32> to vector<8x256xf32>
    %78 = arith.mulf %76, %77 : vector<8x256xf32>
    %79 = math.sin %78 : vector<8x256xf32>
    %80 = arith.mulf %79, %79 : vector<8x256xf32>
    %81 = vector.broadcast %50 : vector<8x1xf32> to vector<8x256xf32>
    %82 = arith.mulf %81, %80 : vector<8x256xf32>
    %83 = arith.addf %76, %82 : vector<8x256xf32>
    %cst_21 = arith.constant dense<0.000000e+00> : vector<8x256xf32>
    %84 = tpu.matmul %55, %83, %cst_21 {dimension_numbers = #tpu.dot_dimension_numbers<[1], [0], [0], [1], [0, 0, 1, 1], [], []>} : vector<8x8xf32>, vector<8x256xf32>, vector<8x256xf32> -> vector<8x256xf32>
    %85 = vector.broadcast %51 : vector<8x1xf32> to vector<8x256xf32>
    %86 = arith.addf %84, %85 : vector<8x256xf32>
    %87 = arith.addf %45, %86 : vector<8x256xf32>
    %88 = vector.extract_strided_slice %3 {offsets = [0, 12], sizes = [8, 1], strides = [1, 1]} : vector<8x14xf32> to vector<8x1xf32>
    %89 = vector.extract_strided_slice %3 {offsets = [0, 13], sizes = [8, 1], strides = [1, 1]} : vector<8x14xf32> to vector<8x1xf32>
    %90 = vector.broadcast %88 : vector<8x1xf32> to vector<8x256xf32>
    %91 = arith.mulf %87, %90 : vector<8x256xf32>
    %92 = math.sin %91 : vector<8x256xf32>
    %93 = arith.mulf %92, %92 : vector<8x256xf32>
    %94 = vector.broadcast %89 : vector<8x1xf32> to vector<8x256xf32>
    %95 = arith.mulf %94, %93 : vector<8x256xf32>
    %96 = arith.addf %87, %95 : vector<8x256xf32>
    %c0_22 = arith.constant 0 : index
    %c0_23 = arith.constant 0 : index
    %97 = vector.load %arg4[%c0_22, %c0_23] : memref<16x17xf32, #tpu.memory_space<vmem>>, vector<16x17xf32>
    %98 = vector.extract_strided_slice %97 {offsets = [0, 0], sizes = [16, 16], strides = [1, 1]} : vector<16x17xf32> to vector<16x16xf32>
    %99 = vector.extract_strided_slice %97 {offsets = [0, 16], sizes = [16, 1], strides = [1, 1]} : vector<16x17xf32> to vector<16x1xf32>
    %c0_24 = arith.constant 0 : index
    %c0_25 = arith.constant 0 : index
    %100 = vector.load %arg5[%c0_24, %c0_25] : memref<256x256xf32, #tpu.memory_space<vmem>>, vector<256x256xf32>
    %cst_26 = arith.constant dense<0.000000e+00> : vector<8x256xf32>
    %101 = tpu.matmul %96, %100, %cst_26 {dimension_numbers = #tpu.dot_dimension_numbers<[1], [0], [0], [1], [0, 0, 1, 1], [], []>} : vector<8x256xf32>, vector<256x256xf32>, vector<8x256xf32> -> vector<8x256xf32>
    %102 = vector.extract_strided_slice %101 {offsets = [0, 0], sizes = [8, 128], strides = [1, 1]} : vector<8x256xf32> to vector<8x128xf32>
    %103 = vector.extract_strided_slice %101 {offsets = [0, 128], sizes = [8, 128], strides = [1, 1]} : vector<8x256xf32> to vector<8x128xf32>
    %104 = tpu.concatenate %102, %103 in 0 : vector<8x128xf32>, vector<8x128xf32> -> vector<16x128xf32>
    %cst_27 = arith.constant dense<0.000000e+00> : vector<16x128xf32>
    %105 = tpu.matmul %98, %104, %cst_27 {dimension_numbers = #tpu.dot_dimension_numbers<[1], [0], [0], [1], [0, 0, 1, 1], [], []>} : vector<16x16xf32>, vector<16x128xf32>, vector<16x128xf32> -> vector<16x128xf32>
    %106 = vector.broadcast %99 : vector<16x1xf32> to vector<16x128xf32>
    %107 = arith.addf %105, %106 : vector<16x128xf32>
    %c0_28 = arith.constant 0 : index
    %c0_29 = arith.constant 0 : index
    %c0_30 = arith.constant 0 : index
    %108 = vector.load %arg6[%c0_28, %c0_29, %c0_30] : memref<1x16x128xf32, #tpu.memory_space<vmem>>, vector<1x16x128xf32>
    %109 = vector.shape_cast %108 : vector<1x16x128xf32> to vector<16x128xf32>
    %110 = vector.shape_cast %107 : vector<16x128xf32> to vector<1x16x128xf32>
    tpu.vector_store %arg6[%c0_28, %c0_29, %c0_30], %110 {strides = array<i32>} : memref<1x16x128xf32, #tpu.memory_space<vmem>>, vector<1x16x128xf32>,
    return
  }
  func.func @transform_0(%arg0: i32) -> (i32, i32, i32) {
    %c0_i32 = arith.constant 0 : i32
    %c0_i32_0 = arith.constant 0 : i32
    %c0_i32_1 = arith.constant 0 : i32
    return %arg0, %c0_i32, %c0_i32_0 : i32, i32, i32
  }
  func.func @transform_1(%arg0: i32) -> (i32, i32) {
    %c0_i32 = arith.constant 0 : i32
    %c0_i32_0 = arith.constant 0 : i32
    %c0_i32_1 = arith.constant 0 : i32
    return %c0_i32, %c0_i32_0 : i32, i32
  }
  func.func @transform_2(%arg0: i32) -> (i32, i32, i32) {
    %c0_i32 = arith.constant 0 : i32
    %c0_i32_0 = arith.constant 0 : i32
    %c0_i32_1 = arith.constant 0 : i32
    %c0_i32_2 = arith.constant 0 : i32
    return %c0_i32, %c0_i32_0, %c0_i32_1 : i32, i32, i32
  }
  func.func @transform_3(%arg0: i32) -> (i32, i32) {
    %c0_i32 = arith.constant 0 : i32
    %c0_i32_0 = arith.constant 0 : i32
    %c0_i32_1 = arith.constant 0 : i32
    return %c0_i32, %c0_i32_0 : i32, i32
  }
  func.func @transform_4(%arg0: i32) -> (i32, i32) {
    %c0_i32 = arith.constant 0 : i32
    %c0_i32_0 = arith.constant 0 : i32
    %c0_i32_1 = arith.constant 0 : i32
    return %c0_i32, %c0_i32_0 : i32, i32
  }
  func.func @transform_5(%arg0: i32) -> (i32, i32, i32) {
    %c0_i32 = arith.constant 0 : i32
    %c0_i32_0 = arith.constant 0 : i32
    %c0_i32_1 = arith.constant 0 : i32
    return %arg0, %c0_i32, %c0_i32_0 : i32, i32, i32
  }
}

</mosaic_0001>

<llo_original>
// kernel: ss_encoder_block.1
$region0: #{ss_encoder_block.1}
  #allocation0 [shape = 'u32[]', space=smem, size = 0x4, offset = 0x4, fixed_abs, tag = 'smem constant byte address 0x4 - core index']
  #allocation1 [shape = 'u32[144,128]{1,0:T(1,128)}', space=vmem, size = 0x12000, scoped, tag = 'internal scratch']
  %s0 = inlined_call_operand.vmem [shape: f32[2,8,256], index: 0, kind: input, shape index: {}]
  %s1 = inlined_call_operand.vmem [shape: f32[8,14], index: 1, kind: input, shape index: {}]
  %s2 = inlined_call_operand.vmem [shape: f32[2,8,32], index: 2, kind: input, shape index: {}]
  %s3 = inlined_call_operand.vmem [shape: f32[16,17], index: 3, kind: input, shape index: {}]
  %s4 = inlined_call_operand.vmem [shape: f32[256,256], index: 4, kind: input, shape index: {}]
  %s5 = inlined_call_operand.hbm [shape: f32[2,16,128], index: 5, kind: output, shape index: {}]
  %s6 = sld [smem:[#allocation0]]
  $region53: #{ss_encoder_block.1} parent=0
    _
  %s8 = ssub.s32 1, %s6
  %s9 = scalar_select 0, %s8, %s6
  $region1: #{ss_encoder_block.1} parent=0
    #allocation2 [shape = 'u8[16384]{0}', space=vmem, size = 0x4000, scoped, tag = 'output window, operand 0']
    #allocation3 [shape = 's32[2]{0}', space=sflag, size = 0x8, scoped, tag = 'scoped memory for ss_encoder_block.1']
    %10 = vsyncpa [#allocation3], 0
    %s11 = scalar_lea.sflag [#allocation3], 1
    %12 = vsyncpa %s11, 0
    loop: start=0, step=1, limit=4
    $region2: #{ss_encoder_block.1} parent=1 // loop_pre_header
      _
    $region3: #{ss_encoder_block.1} parent=1 // loop_header
      %s14 = sphi 0, %s18
      %p15 = scmp.ge.s32.totalorder %s14, 4
      %s24 = sphi 0, %s26
      %s27 = sphi 0, %s24
      %s28 = sphi 0, %s27
      %s44 = sphi 0, %s28
      %s48 = sphi 0, %s48
      %s50 = sphi 0, %s48
      %s51 = sphi 0, %s50
      %s65 = sphi 0, %s51
      %s69 = sphi 0, %s69
      %s71 = sphi 0, %s69
      %s72 = sphi 0, %s71
      %s86 = sphi 0, %s72
      %s90 = sphi 0, %s90
      %s92 = sphi 0, %s90
      %s93 = sphi 0, %s92
      %s107 = sphi 0, %s93
      %s111 = sphi 0, %s111
      %s113 = sphi 0, %s111
      %s114 = sphi 0, %s113
      %s128 = sphi 0, %s114
      %s134 = sphi 0, %s136
      %s137 = sphi 0, %s134
      %s138 = sphi 0, %s137
      %s154 = sphi 0, %s138
    $region4: #{ss_encoder_block.1} parent=1 // loop_header_branch
      %17 = sbr.rel (%p15) target = $region8
    $region5: #{ss_encoder_block.1} parent=1 // loop_body
      %s19 = ssub.s32 %s14, 1
      %s20 = ssub.s32 %s14, 2
      %s21 = sadd.s32 %s14, 1
      %s22 = ssub.s32 %s14, %s21
      %p23 = scmp.eq.s32.totalorder %s22, 0
      %s25 = sadd.s32 %s24, 1
      %s26 = scalar_select %p23, %s24, %s25
      %p29 = pneg %p23
      %p30 = scmp.eq.s32.totalorder %s14, 1
      %p31 = por %p29, %p30
      %p32 = scmp.ne.s32.totalorder %s24, %s27
      %p33 = scmp.eq.s32.totalorder %s14, 0
      %p34 = por %p32, %p33
      %p35 = scmp.ne.s32.totalorder %s24, %s27
      %p36 = scmp.eq.s32.totalorder %s19, 1
      %p37 = por %p35, %p36
      %p38 = scmp.ne.s32.totalorder %s27, %s28
      %p39 = scmp.eq.s32.totalorder %s19, 0
      %p40 = por %p38, %p39
      %p41 = scmp.ne.s32.totalorder %s27, %s28
      %p42 = scmp.eq.s32.totalorder %s20, 1
      %p43 = por %p41, %p42
      %p45 = scmp.ne.s32.totalorder %s28, %s44
      %p46 = scmp.eq.s32.totalorder %s20, 0
      %p47 = por %p45, %p46
      %s49 = sadd.s32 %s48, 1
      %p52 = scmp.eq.s32.totalorder %s14, 1
      %p53 = scmp.ne.s32.totalorder %s48, %s50
      %p54 = scmp.eq.s32.totalorder %s14, 0
      %p55 = por %p53, %p54
      %p56 = scmp.ne.s32.totalorder %s48, %s50
      %p57 = scmp.eq.s32.totalorder %s19, 1
      %p58 = por %p56, %p57
      %p59 = scmp.ne.s32.totalorder %s50, %s51
      %p60 = scmp.eq.s32.totalorder %s19, 0
      %p61 = por %p59, %p60
      %p62 = scmp.ne.s32.totalorder %s50, %s51
      %p63 = scmp.eq.s32.totalorder %s20, 1
      %p64 = por %p62, %p63
      %p66 = scmp.ne.s32.totalorder %s51, %s65
      %p67 = scmp.eq.s32.totalorder %s20, 0
      %p68 = por %p66, %p67
      %s70 = sadd.s32 %s69, 1
      %p73 = scmp.eq.s32.totalorder %s14, 1
      %p74 = scmp.ne.s32.totalorder %s69, %s71
      %p75 = scmp.eq.s32.totalorder %s14, 0
      %p76 = por %p74, %p75
      %p77 = scmp.ne.s32.totalorder %s69, %s71
      %p78 = scmp.eq.s32.totalorder %s19, 1
      %p79 = por %p77, %p78
      %p80 = scmp.ne.s32.totalorder %s71, %s72
      %p81 = scmp.eq.s32.totalorder %s19, 0
      %p82 = por %p80, %p81
      %p83 = scmp.ne.s32.totalorder %s71, %s72
      %p84 = scmp.eq.s32.totalorder %s20, 1
      %p85 = por %p83, %p84
      %p87 = scmp.ne.s32.totalorder %s72, %s86
      %p88 = scmp.eq.s32.totalorder %s20, 0
      %p89 = por %p87, %p88
      %s91 = sadd.s32 %s90, 1
      %p94 = scmp.eq.s32.totalorder %s14, 1
      %p95 = scmp.ne.s32.totalorder %s90, %s92
      %p96 = scmp.eq.s32.totalorder %s14, 0
      %p97 = por %p95, %p96
      %p98 = scmp.ne.s32.totalorder %s90, %s92
      %p99 = scmp.eq.s32.totalorder %s19, 1
      %p100 = por %p98, %p99
      %p101 = scmp.ne.s32.totalorder %s92, %s93
      %p102 = scmp.eq.s32.totalorder %s19, 0
      %p103 = por %p101, %p102
      %p104 = scmp.ne.s32.totalorder %s92, %s93
      %p105 = scmp.eq.s32.totalorder %s20, 1
      %p106 = por %p104, %p105
      %p108 = scmp.ne.s32.totalorder %s93, %s107
      %p109 = scmp.eq.s32.totalorder %s20, 0
      %p110 = por %p108, %p109
      %s112 = sadd.s32 %s111, 1
      %p115 = scmp.eq.s32.totalorder %s14, 1
      %p116 = scmp.ne.s32.totalorder %s111, %s113
      %p117 = scmp.eq.s32.totalorder %s14, 0
      %p118 = por %p116, %p117
      %p119 = scmp.ne.s32.totalorder %s111, %s113
      %p120 = scmp.eq.s32.totalorder %s19, 1
      %p121 = por %p119, %p120
      %p122 = scmp.ne.s32.totalorder %s113, %s114
      %p123 = scmp.eq.s32.totalorder %s19, 0
      %p124 = por %p122, %p123
      %p125 = scmp.ne.s32.totalorder %s113, %s114
      %p126 = scmp.eq.s32.totalorder %s20, 1
      %p127 = por %p125, %p126
      %p129 = scmp.ne.s32.totalorder %s114, %s128
      %p130 = scmp.eq.s32.totalorder %s20, 0
      %p131 = por %p129, %p130
      %s132 = ssub.s32 %s14, %s21
      %p133 = scmp.eq.s32.totalorder %s132, 0
      %s135 = sadd.s32 %s134, 1
      %s136 = scalar_select %p133, %s134, %s135
      %p139 = pneg %p133
      %p140 = scmp.eq.s32.totalorder %s14, 1
      %p141 = por %p139, %p140
      %p142 = scmp.ne.s32.totalorder %s134, %s137
      %p143 = scmp.eq.s32.totalorder %s14, 0
      %p144 = por %p142, %p143
      %p145 = scmp.ne.s32.totalorder %s134, %s137
      %p146 = scmp.eq.s32.totalorder %s19, 1
      %p147 = por %p145, %p146
      %p148 = scmp.ne.s32.totalorder %s137, %s138
      %p149 = scmp.eq.s32.totalorder %s19, 0
      %p150 = por %p148, %p149
      %p151 = scmp.ne.s32.totalorder %s137, %s138
      %p152 = scmp.eq.s32.totalorder %s20, 1
      %p153 = por %p151, %p152
      %p155 = scmp.ne.s32.totalorder %s138, %s154
      %p156 = scmp.eq.s32.totalorder %s20, 0
      %p157 = por %p155, %p156
      %p158 = scmp.le.s32.totalorder 1, %s14
      %p159 = scmp.lt.s32.totalorder %s14, 3
      %p160 = pnand %p158, %p159
      %p161 = pneg %p160
      // Predicated region
      $region9: #{ss_encoder_block.1} parent=5 // pred_check
        _
      $region10: #{ss_encoder_block.1} parent=5 // pred_check_branch
        %163 = sbr.rel (%p160) target = $region12
      $region11: #{ss_encoder_block.1} parent=5 // pred_region
        %s164 = ssub.s32 %s14, 1
        // Predicated region
        $region13: #{ss_encoder_block.1} parent=11 // pred_check
          %p165 = pneg %p61
        $region14: #{ss_encoder_block.1} parent=11 // pred_check_branch
          %167 = sbr.rel (%p165) target = $region16
        $region15: #{ss_encoder_block.1} parent=11 // pred_region
          _
        $region16: #{ss_encoder_block.1} parent=11 // pred_fallthru
          _
        // Predicated region
        $region17: #{ss_encoder_block.1} parent=11 // pred_check
          %p168 = pneg %p82
        $region18: #{ss_encoder_block.1} parent=11 // pred_check_branch
          %170 = sbr.rel (%p168) target = $region20
        $region19: #{ss_encoder_block.1} parent=11 // pred_region
          _
        $region20: #{ss_encoder_block.1} parent=11 // pred_fallthru
          _
        // Predicated region
        $region21: #{ss_encoder_block.1} parent=11 // pred_check
          %p171 = pneg %p103
        $region22: #{ss_encoder_block.1} parent=11 // pred_check_branch
          %173 = sbr.rel (%p171) target = $region24
        $region23: #{ss_encoder_block.1} parent=11 // pred_region
          _
        $region24: #{ss_encoder_block.1} parent=11 // pred_fallthru
          _
        // Predicated region
        $region25: #{ss_encoder_block.1} parent=11 // pred_check
          %p174 = pneg %p124
        $region26: #{ss_encoder_block.1} parent=11 // pred_check_branch
          %176 = sbr.rel (%p174) target = $region28
        $region27: #{ss_encoder_block.1} parent=11 // pred_region
          _
        $region28: #{ss_encoder_block.1} parent=11 // pred_fallthru
          _
      $region12: #{ss_encoder_block.1} parent=5 // pred_fallthru
        _
      %p177 = scmp.lt.s32.totalorder %s14, 2
      // Predicated region
      $region29: #{ss_encoder_block.1} parent=5 // pred_check
        %p178 = pneg %p177
      $region30: #{ss_encoder_block.1} parent=5 // pred_check_branch
        %180 = sbr.rel (%p178) target = $region32
      $region31: #{ss_encoder_block.1} parent=5 // pred_region
        // Predicated region
        $region33: #{ss_encoder_block.1} parent=31 // pred_check
          %p181 = pneg %p34
        $region34: #{ss_encoder_block.1} parent=31 // pred_check_branch
          %183 = sbr.rel (%p181) target = $region36
        $region35: #{ss_encoder_block.1} parent=31 // pred_region
          %p184 = scmp.lt.s32.totalorder %s14, 1
          %s185 = scalar_select %p184, %s14, 1
          %s186 = smul.addr %s185, 2
          %s187 = smul.addr %s186, 8
          %s188 = scalar_lea.vmem %s0, %s187
        $region36: #{ss_encoder_block.1} parent=31 // pred_fallthru
          _
      $region32: #{ss_encoder_block.1} parent=5 // pred_fallthru
        _
      %p189 = scmp.le.s32.totalorder 1, %s14
      %p190 = scmp.lt.s32.totalorder %s14, 3
      %p191 = pnand %p189, %p190
      %p192 = pneg %p191
      // Predicated region
      $region37: #{ss_encoder_block.1} parent=5 // pred_check
        _
      $region38: #{ss_encoder_block.1} parent=5 // pred_check_branch
        %194 = sbr.rel (%p191) target = $region40
      $region39: #{ss_encoder_block.1} parent=5 // pred_region
        %s195 = ssub.s32 %s14, 1
        %p196 = scmp.lt.s32.totalorder %s19, 1
        %s197 = scalar_select %p196, %s19, 1
        %s198 = smul.addr %s197, 2
        %s199 = smul.addr %s198, 8
        %s200 = scalar_lea.vmem %s0, %s199
        %p201 = pneg %p40
        %p202 = pneg %p37
        %p203 = pneg %p61
        %p204 = pneg %p58
        %p205 = pneg %p82
        %p206 = pneg %p79
        %p207 = pneg %p103
        %p208 = pneg %p100
        %p209 = pneg %p124
        %p210 = pneg %p121
        %p211 = pneg %p150
        %p212 = pneg %p147
        %s213 = sand.u32 %s137, 1
        %s214 = scalar_lea.sflag [#allocation3], %s213
        %s215 = sand.u32 %s137, 1
        %s216 = smul.addr %s215, 16
        %s217 = scalar_lea.vmem [#allocation2], %s216
        %p218 = scmp.lt.s32.totalorder %s19, 1
        %s219 = scalar_select %p218, %s19, 1
        %s220 = smul.addr %s219, 2
        %s221 = smul.addr %s220, 8
        %s222 = scalar_lea.vmem %s0, %s221
        %v223 = vld [vmem:[%s222] sm:$0xff]
        %v224 = vld [vmem:[%s222 + $0x8] sm:$0xff]
        %v225 = vlaneseq
        %v226 = vand.u32 %v225, 127
        %v227 = vadd.s32 %v226, 128
        %v228 = vld [vmem:[%s1] sm:$0xff]
        %v229 = vld [vmem:[%s2] sm:$0xff]
        %231 = vset.pattern.permute.xlu0 0
        %232 = vperm.xlu0 %231, %v228
        %v233 = vpop.permute.xlu0 %232
        %v235 = vmul.f32 %v223, %v233
        %v236 = vmul.f32 %v224, %v233
        %v237 = vand.u32 2147483647, %v235
        %vm238 = vcmp.le.f32.partialorder %v237, 0.7853982
        %vm239 = vcmp.lt.s32.totalorder %v235, 0
        %v240 = vand.u32 %v235, 2139095040
        %v241 = vshrl.u32 %v240, 23
        %v242 = vsub.s32 %v241, 127
        %v243 = vand.u32 2147483647, %v235
        %v244 = vand.u32 %v243, 8388607
        %v245 = vor.u32 %v244, 8388608
        %v246 = vsub.s32 0, %v245
        %v247 = vadd.s32 %v242, 1
        %vm248 = vcmp.gt.s32.totalorder %v247, 0
        %v249 = vsel %vm248, %v247, 0
        %v250 = vshrl.u32 %v249, 5
        %v251 = vand.u32 %v249, 31
        %v252 = vsub.s32 32, %v251
        %v253 = vshrl.u32 683565275, %v252
        %v254 = vshll.u32 683565275, %v251
        %v255 = vshrl.u32 2475754826, %v252
        %v256 = vor.u32 %v254, %v255
        %v257 = vshll.u32 2475754826, %v251
        %v258 = vshrl.u32 2131351028, %v252
        %v259 = vor.u32 %v257, %v258
        %v260 = vshll.u32 2131351028, %v251
        %v261 = vshrl.u32 2102212464, %v252
        %v262 = vor.u32 %v260, %v261
        %v263 = vshll.u32 2102212464, %v251
        %v264 = vshrl.u32 920167782, %v252
        %v265 = vor.u32 %v263, %v264
        %v266 = vshll.u32 920167782, %v251
        %v267 = vshrl.u32 1326507024, %v252
        %v268 = vor.u32 %v266, %v267
        %vm269 = vcmp.lt.s32.totalorder %v250, 1
        %vm270 = vcmp.lt.s32.totalorder %v250, 2
        %vm271 = vcmp.lt.s32.totalorder %v250, 3
        %vm272 = vcmp.lt.s32.totalorder %v250, 4
        %v273 = vsel %vm269, %v253, %v256
        %v274 = vsel %vm272, %v262, 2102212464
        %v275 = vsel %vm271, %v259, %v274
        %v276 = vsel %vm270, %v273, %v275
        %v277 = vsel %vm269, %v256, %v259
        %v278 = vsel %vm272, %v265, 920167782
        %v279 = vsel %vm271, %v262, %v278
        %v280 = vsel %vm270, %v277, %v279
        %v281 = vsel %vm269, %v259, %v262
        %v282 = vsel %vm272, %v268, 1326507024
        %v283 = vsel %vm271, %v265, %v282
        %v284 = vsel %vm270, %v281, %v283
        %v285 = vshll.u32 %v245, 8
        %v286 = vmul.u32.u64.compose %v285, %v284
        %v287 = vextract.low.u32 %v286
        %v288 = vextract.high.u32 %v286
        %v289 = vmul.u32.u64.compose %v285, %v280
        %v290 = vextract.low.u32 %v289
        %v291 = vextract.high.u32 %v289
        %v292 = vmul.u32 %v285, %v276
        %v293 = vadd.s32 %v288, %v290
        %vm294 = vc.u32 %v288, %v290
        %v295 = vadd.s32 %v291, 1
        %v296 = vsel %vm294, %v295, %v291
        %v297 = vadd.s32 %v292, %v296
        %v298 = vadd.s32 %v297, 536870912
        %v299 = vshrl.u32 %v298, 30
        %v300 = vshll.u32 %v299, 30
        %v301 = vsub.s32 %v297, %v300
        %vm302 = vcmp.lt.s32.totalorder %v301, 0
        %v303 = vsub.s32 0, %v301
        %v304 = vsel %vm302, %v303, %v301
        %v305 = vclz %v304
        %v306 = vsub.s32 %v305, 2
        %vm307 = vcmp.gt.s32.totalorder 0, %v306
        %v308 = vsel %vm307, 0, %v306
        %v309 = vsub.s32 32, %v308
        %v310 = vshll.u32 %v301, %v308
        %v311 = vshrl.u32 %v293, %v309
        %v312 = vor.u32 %v310, %v311
        %v313 = vsub.s32 4294967266, %v308
        %v314 = vadd.s32 %v313, 127
        %v315 = vshll.u32 %v314, 23
        %v316 = vor.u32 4788187, %v315
        %v317 = vand.u32 2147483647, %v316
        %v319 = vcvt.s32.f32 %v312
        %v320 = vmul.f32 %v319, %v317
        %v321 = vxor.u32 %v320, 2147483648
        %v322 = vsel %vm239, %v321, %v320
        %v323 = vsub.s32 4, %v299
        %v324 = vsel %vm239, %v323, %v299
        %v325 = vsel %vm238, %v235, %v322
        %v326 = vsel %vm238, 0, %v324
        %v327 = vcosq.f32.pop %v325
        %v328 = vsinq.f32.pop %v325
        %vm329 = vweird.f32 %v235
        %v330 = vadd.s32 %v326, 3
        %v331 = vand.u32 %v330, 3
        %vm332 = vcmp.lt.s32.totalorder %v331, 2
        %vm333 = vcmp.eq.s32.totalorder %v331, 0
        %v334 = vxor.u32 %v328, 2147483648
        %v335 = vsel %vm333, %v327, %v334
        %vm336 = vcmp.eq.s32.totalorder %v331, 2
        %v337 = vxor.u32 %v327, 2147483648
        %v338 = vsel %vm336, %v337, %v328
        %v339 = vsel %vm332, %v335, %v338
        %v340 = vsel %vm329, nan, %v339
        %v341 = vand.u32 2147483647, %v236
        %vm342 = vcmp.le.f32.partialorder %v341, 0.7853982
        %vm343 = vcmp.lt.s32.totalorder %v236, 0
        %v344 = vand.u32 %v236, 2139095040
        %v345 = vshrl.u32 %v344, 23
        %v346 = vsub.s32 %v345, 127
        %v347 = vand.u32 2147483647, %v236
        %v348 = vand.u32 %v347, 8388607
        %v349 = vor.u32 %v348, 8388608
        %v350 = vsub.s32 0, %v349
        %v351 = vadd.s32 %v346, 1
        %vm352 = vcmp.gt.s32.totalorder %v351, 0
        %v353 = vsel %vm352, %v351, 0
        %v354 = vshrl.u32 %v353, 5
        %v355 = vand.u32 %v353, 31
        %v356 = vsub.s32 32, %v355
        %v357 = vshrl.u32 683565275, %v356
        %v358 = vshll.u32 683565275, %v355
        %v359 = vshrl.u32 2475754826, %v356
        %v360 = vor.u32 %v358, %v359
        %v361 = vshll.u32 2475754826, %v355
        %v362 = vshrl.u32 2131351028, %v356
        %v363 = vor.u32 %v361, %v362
        %v364 = vshll.u32 2131351028, %v355
        %v365 = vshrl.u32 2102212464, %v356
        %v366 = vor.u32 %v364, %v365
        %v367 = vshll.u32 2102212464, %v355
        %v368 = vshrl.u32 920167782, %v356
        %v369 = vor.u32 %v367, %v368
        %v370 = vshll.u32 920167782, %v355
        %v371 = vshrl.u32 1326507024, %v356
        %v372 = vor.u32 %v370, %v371
        %vm373 = vcmp.lt.s32.totalorder %v354, 1
        %vm374 = vcmp.lt.s32.totalorder %v354, 2
        %vm375 = vcmp.lt.s32.totalorder %v354, 3
        %vm376 = vcmp.lt.s32.totalorder %v354, 4
        %v377 = vsel %vm373, %v357, %v360
        %v378 = vsel %vm376, %v366, 2102212464
        %v379 = vsel %vm375, %v363, %v378
        %v380 = vsel %vm374, %v377, %v379
        %v381 = vsel %vm373, %v360, %v363
        %v382 = vsel %vm376, %v369, 920167782
        %v383 = vsel %vm375, %v366, %v382
        %v384 = vsel %vm374, %v381, %v383
        %v385 = vsel %vm373, %v363, %v366
        %v386 = vsel %vm376, %v372, 1326507024
        %v387 = vsel %vm375, %v369, %v386
        %v388 = vsel %vm374, %v385, %v387
        %v389 = vshll.u32 %v349, 8
        %v390 = vmul.u32.u64.compose %v389, %v388
        %v391 = vextract.low.u32 %v390
        %v392 = vextract.high.u32 %v390
        %v393 = vmul.u32.u64.compose %v389, %v384
        %v394 = vextract.low.u32 %v393
        %v395 = vextract.high.u32 %v393
        %v396 = vmul.u32 %v389, %v380
        %v397 = vadd.s32 %v392, %v394
        %vm398 = vc.u32 %v392, %v394
        %v399 = vadd.s32 %v395, 1
        %v400 = vsel %vm398, %v399, %v395
        %v401 = vadd.s32 %v396, %v400
        %v402 = vadd.s32 %v401, 536870912
        %v403 = vshrl.u32 %v402, 30
        %v404 = vshll.u32 %v403, 30
        %v405 = vsub.s32 %v401, %v404
        %vm406 = vcmp.lt.s32.totalorder %v405, 0
        %v407 = vsub.s32 0, %v405
        %v408 = vsel %vm406, %v407, %v405
        %v409 = vclz %v408
        %v410 = vsub.s32 %v409, 2
        %vm411 = vcmp.gt.s32.totalorder 0, %v410
        %v412 = vsel %vm411, 0, %v410
        %v413 = vsub.s32 32, %v412
        %v414 = vshll.u32 %v405, %v412
        %v415 = vshrl.u32 %v397, %v413
        %v416 = vor.u32 %v414, %v415
        %v417 = vsub.s32 4294967266, %v412
        %v418 = vadd.s32 %v417, 127
        %v419 = vshll.u32 %v418, 23
        %v420 = vor.u32 4788187, %v419
        %v421 = vand.u32 2147483647, %v420
        %v423 = vcvt.s32.f32 %v416
        %v424 = vmul.f32 %v423, %v421
        %v425 = vxor.u32 %v424, 2147483648
        %v426 = vsel %vm343, %v425, %v424
        %v427 = vsub.s32 4, %v403
        %v428 = vsel %vm343, %v427, %v403
        %v429 = vsel %vm342, %v236, %v426
        %v430 = vsel %vm342, 0, %v428
        %v431 = vcosq.f32.pop %v429
        %v432 = vsinq.f32.pop %v429
        %vm433 = vweird.f32 %v236
        %v434 = vadd.s32 %v430, 3
        %v435 = vand.u32 %v434, 3
        %vm436 = vcmp.lt.s32.totalorder %v435, 2
        %vm437 = vcmp.eq.s32.totalorder %v435, 0
        %v438 = vxor.u32 %v432, 2147483648
        %v439 = vsel %vm437, %v431, %v438
        %vm440 = vcmp.eq.s32.totalorder %v435, 2
        %v441 = vxor.u32 %v431, 2147483648
        %v442 = vsel %vm440, %v441, %v432
        %v443 = vsel %vm436, %v439, %v442
        %v444 = vsel %vm433, nan, %v443
        %v445 = vmul.f32 %v340, %v340
        %v446 = vmul.f32 %v444, %v444
        %447 = vset.pattern.permute.xlu0 1
        %448 = vperm.xlu0 %447, %v228
        %v449 = vpop.permute.xlu0 %448
        %v451 = vmul.f32 %v449, %v445
        %v452 = vmul.f32 %v449, %v446
        %v453 = vadd.f32 %v223, %v451
        %v454 = vadd.f32 %v224, %v452
        %455 = vrot.lane.b32.xlu0 %v453, 1
        %v456 = vpop.permute.xlu0 %455
        %457 = vrot.lane.b32.xlu0 %v454, 1
        %v458 = vpop.permute.xlu0 %457
        %vm459 = vcmp.lt.s32.totalorder %v226, 1
        %v460 = vsel %vm459, %v456, %v458
        %v461 = vsel %vm459, %v458, %v456
        %vm462 = vcmp.ge.s32.totalorder %v226, 1
        %vm463 = vcmp.ge.s32.totalorder %v227, 1
        %v464 = vsel %vm462, %v461, 0.0
        %v465 = vsel %vm463, %v460, 0.0
        %466 = vrot.lane.b32.xlu0 %v453, 127
        %v467 = vpop.permute.xlu0 %466
        %468 = vrot.lane.b32.xlu0 %v454, 127
        %v469 = vpop.permute.xlu0 %468
        %vm470 = vcmp.lt.s32.totalorder %v226, 127
        %v471 = vsel %vm470, %v467, %v469
        %v472 = vsel %vm470, %v469, %v467
        %vm473 = vcmp.lt.s32.totalorder %v226, 255
        %vm474 = vcmp.lt.s32.totalorder %v227, 255
        %v475 = vsel %vm473, %v471, 0.0
        %v476 = vsel %vm474, %v472, 0.0
        %477 = vset.pattern.permute.xlu0 2
        %478 = vperm.xlu0 %477, %v228
        %v479 = vpop.permute.xlu0 %478
        %vm481 = vcmask 195584
        %v483 = vsel %vm481, %v229, 0
        %485 = vmatprep.subr.mxu0 0.0
        %486 = vmatpush1.msra.mxu0 0.0
        %487 = vmatprep.subr.mxu0 0.0
        %488 = vmatpush1.msra.mxu0 0.0
        %489 = vmatprep.subr.mxu0 0.0
        %490 = vmatpush1.msra.mxu0 0.0
        %491 = vmatprep.subr.mxu0 0.0
        %492 = vmatpush1.msra.mxu0 0.0
        %493 = vmatprep.subr.mxu0 0.0
        %494 = vmatpush1.msra.mxu0 0.0
        %495 = vmatprep.subr.mxu0 0.0
        %496 = vmatpush1.msra.mxu0 0.0
        %497 = vmatprep.subr.mxu0 0.0
        %498 = vmatpush1.msra.mxu0 0.0
        %499 = vmatprep.subr.mxu0 0.0
        %500 = vmatpush1.msra.mxu0 0.0
        %501 = vmatprep.subr.mxu0 0.0
        %502 = vmatpush1.msra.mxu0 0.0
        %503 = vmatprep.subr.mxu0 0.0
        %504 = vmatpush1.msra.mxu0 0.0
        %505 = vmatprep.subr.mxu0 0.0
        %506 = vmatpush1.msra.mxu0 0.0
        %507 = vmatprep.subr.mxu0 0.0
        %508 = vmatpush1.msra.mxu0 0.0
        %509 = vmatprep.subr.mxu0 0.0
        %510 = vmatpush1.msra.mxu0 0.0
        %511 = vmatprep.subr.mxu0 %v476
        %512 = vmatpush1.msra.mxu0 %v475
        %513 = vmatprep.subr.mxu0 %v454
        %514 = vmatpush1.msra.mxu0 %v453
        %515 = vmatprep.subr.mxu0 %v465
        %516 = vmatpush1.msra.mxu0 %v464
        %517 = vmatprep.subr.mxu0 0.0
        %518 = vmatpush2.msra.mxu0 0.0
        %519 = vmatprep.subr.mxu0 0.0
        %520 = vmatpush2.msra.mxu0 0.0
        %521 = vmatprep.subr.mxu0 0.0
        %522 = vmatpush2.msra.mxu0 0.0
        %523 = vmatprep.subr.mxu0 0.0
        %524 = vmatpush2.msra.mxu0 0.0
        %525 = vmatprep.subr.mxu0 0.0
        %526 = vmatpush2.msra.mxu0 0.0
        %527 = vmatprep.subr.mxu0 0.0
        %528 = vmatpush2.msra.mxu0 0.0
        %529 = vmatprep.subr.mxu0 0.0
        %530 = vmatpush2.msra.mxu0 0.0
        %531 = vmatprep.subr.mxu0 0.0
        %532 = vmatpush2.msra.mxu0 0.0
        %533 = vmatprep.subr.mxu0 0.0
        %534 = vmatpush2.msra.mxu0 0.0
        %535 = vmatprep.subr.mxu0 0.0
        %536 = vmatpush2.msra.mxu0 0.0
        %537 = vmatprep.subr.mxu0 0.0
        %538 = vmatpush2.msra.mxu0 0.0
        %539 = vmatprep.subr.mxu0 0.0
        %540 = vmatpush2.msra.mxu0 0.0
        %541 = vmatprep.subr.mxu0 0.0
        %542 = vmatpush2.msra.mxu0 0.0
        %543 = vmatprep.subr.mxu0 0.0
        %544 = vmatpush2.msra.mxu0 0.0
        %545 = vmatprep.subr.mxu0 0.0
        %546 = vmatpush2.msra.mxu0 0.0
        %547 = vmatprep.subr.mxu0 0.0
        %548 = vmatpush2.msra.mxu0 0.0
        %549 = vmatprep.mubr.f32.mxu0 0.0
        %550 = vmatmul.mubr.f32.gmra.mxu0 %v483
        %v551 = vpop.f32.mrf.mxu0
        %v552 = vadd.f32 %v479, %v551
        %v553 = vpop.f32.mrf.mxu0
        %v554 = vadd.f32 %v479, %v553
        %555 = vdwg.mxu0
        %556 = vset.pattern.permute.xlu0 3
        %557 = vperm.xlu0 %556, %v228
        %v558 = vpop.permute.xlu0 %557
        %v560 = vmul.f32 %v552, %v558
        %v561 = vmul.f32 %v554, %v558
        %v562 = vand.u32 2147483647, %v560
        %vm563 = vcmp.le.f32.partialorder %v562, 0.7853982
        %vm564 = vcmp.lt.s32.totalorder %v560, 0
        %v565 = vand.u32 %v560, 2139095040
        %v566 = vshrl.u32 %v565, 23
        %v567 = vsub.s32 %v566, 127
        %v568 = vand.u32 2147483647, %v560
        %v569 = vand.u32 %v568, 8388607
        %v570 = vor.u32 %v569, 8388608
        %v571 = vsub.s32 0, %v570
        %v572 = vadd.s32 %v567, 1
        %vm573 = vcmp.gt.s32.totalorder %v572, 0
        %v574 = vsel %vm573, %v572, 0
        %v575 = vshrl.u32 %v574, 5
        %v576 = vand.u32 %v574, 31
        %v577 = vsub.s32 32, %v576
        %v578 = vshrl.u32 683565275, %v577
        %v579 = vshll.u32 683565275, %v576
        %v580 = vshrl.u32 2475754826, %v577
        %v581 = vor.u32 %v579, %v580
        %v582 = vshll.u32 2475754826, %v576
        %v583 = vshrl.u32 2131351028, %v577
        %v584 = vor.u32 %v582, %v583
        %v585 = vshll.u32 2131351028, %v576
        %v586 = vshrl.u32 2102212464, %v577
        %v587 = vor.u32 %v585, %v586
        %v588 = vshll.u32 2102212464, %v576
        %v589 = vshrl.u32 920167782, %v577
        %v590 = vor.u32 %v588, %v589
        %v591 = vshll.u32 920167782, %v576
        %v592 = vshrl.u32 1326507024, %v577
        %v593 = vor.u32 %v591, %v592
        %vm594 = vcmp.lt.s32.totalorder %v575, 1
        %vm595 = vcmp.lt.s32.totalorder %v575, 2
        %vm596 = vcmp.lt.s32.totalorder %v575, 3
        %vm597 = vcmp.lt.s32.totalorder %v575, 4
        %v598 = vsel %vm594, %v578, %v581
        %v599 = vsel %vm597, %v587, 2102212464
        %v600 = vsel %vm596, %v584, %v599
        %v601 = vsel %vm595, %v598, %v600
        %v602 = vsel %vm594, %v581, %v584
        %v603 = vsel %vm597, %v590, 920167782
        %v604 = vsel %vm596, %v587, %v603
        %v605 = vsel %vm595, %v602, %v604
        %v606 = vsel %vm594, %v584, %v587
        %v607 = vsel %vm597, %v593, 1326507024
        %v608 = vsel %vm596, %v590, %v607
        %v609 = vsel %vm595, %v606, %v608
        %v610 = vshll.u32 %v570, 8
        %v611 = vmul.u32.u64.compose %v610, %v609
        %v612 = vextract.low.u32 %v611
        %v613 = vextract.high.u32 %v611
        %v614 = vmul.u32.u64.compose %v610, %v605
        %v615 = vextract.low.u32 %v614
        %v616 = vextract.high.u32 %v614
        %v617 = vmul.u32 %v610, %v601
        %v618 = vadd.s32 %v613, %v615
        %vm619 = vc.u32 %v613, %v615
        %v620 = vadd.s32 %v616, 1
        %v621 = vsel %vm619, %v620, %v616
        %v622 = vadd.s32 %v617, %v621
        %v623 = vadd.s32 %v622, 536870912
        %v624 = vshrl.u32 %v623, 30
        %v625 = vshll.u32 %v624, 30
        %v626 = vsub.s32 %v622, %v625
        %vm627 = vcmp.lt.s32.totalorder %v626, 0
        %v628 = vsub.s32 0, %v626
        %v629 = vsel %vm627, %v628, %v626
        %v630 = vclz %v629
        %v631 = vsub.s32 %v630, 2
        %vm632 = vcmp.gt.s32.totalorder 0, %v631
        %v633 = vsel %vm632, 0, %v631
        %v634 = vsub.s32 32, %v633
        %v635 = vshll.u32 %v626, %v633
        %v636 = vshrl.u32 %v618, %v634
        %v637 = vor.u32 %v635, %v636
        %v638 = vsub.s32 4294967266, %v633
        %v639 = vadd.s32 %v638, 127
        %v640 = vshll.u32 %v639, 23
        %v641 = vor.u32 4788187, %v640
        %v642 = vand.u32 2147483647, %v641
        %v644 = vcvt.s32.f32 %v637
        %v645 = vmul.f32 %v644, %v642
        %v646 = vxor.u32 %v645, 2147483648
        %v647 = vsel %vm564, %v646, %v645
        %v648 = vsub.s32 4, %v624
        %v649 = vsel %vm564, %v648, %v624
        %v650 = vsel %vm563, %v560, %v647
        %v651 = vsel %vm563, 0, %v649
        %v652 = vcosq.f32.pop %v650
        %v653 = vsinq.f32.pop %v650
        %vm654 = vweird.f32 %v560
        %v655 = vadd.s32 %v651, 3
        %v656 = vand.u32 %v655, 3
        %vm657 = vcmp.lt.s32.totalorder %v656, 2
        %vm658 = vcmp.eq.s32.totalorder %v656, 0
        %v659 = vxor.u32 %v653, 2147483648
        %v660 = vsel %vm658, %v652, %v659
        %vm661 = vcmp.eq.s32.totalorder %v656, 2
        %v662 = vxor.u32 %v652, 2147483648
        %v663 = vsel %vm661, %v662, %v653
        %v664 = vsel %vm657, %v660, %v663
        %v665 = vsel %vm654, nan, %v664
        %v666 = vand.u32 2147483647, %v561
        %vm667 = vcmp.le.f32.partialorder %v666, 0.7853982
        %vm668 = vcmp.lt.s32.totalorder %v561, 0
        %v669 = vand.u32 %v561, 2139095040
        %v670 = vshrl.u32 %v669, 23
        %v671 = vsub.s32 %v670, 127
        %v672 = vand.u32 2147483647, %v561
        %v673 = vand.u32 %v672, 8388607
        %v674 = vor.u32 %v673, 8388608
        %v675 = vsub.s32 0, %v674
        %v676 = vadd.s32 %v671, 1
        %vm677 = vcmp.gt.s32.totalorder %v676, 0
        %v678 = vsel %vm677, %v676, 0
        %v679 = vshrl.u32 %v678, 5
        %v680 = vand.u32 %v678, 31
        %v681 = vsub.s32 32, %v680
        %v682 = vshrl.u32 683565275, %v681
        %v683 = vshll.u32 683565275, %v680
        %v684 = vshrl.u32 2475754826, %v681
        %v685 = vor.u32 %v683, %v684
        %v686 = vshll.u32 2475754826, %v680
        %v687 = vshrl.u32 2131351028, %v681
        %v688 = vor.u32 %v686, %v687
        %v689 = vshll.u32 2131351028, %v680
        %v690 = vshrl.u32 2102212464, %v681
        %v691 = vor.u32 %v689, %v690
        %v692 = vshll.u32 2102212464, %v680
        %v693 = vshrl.u32 920167782, %v681
        %v694 = vor.u32 %v692, %v693
        %v695 = vshll.u32 920167782, %v680
        %v696 = vshrl.u32 1326507024, %v681
        %v697 = vor.u32 %v695, %v696
        %vm698 = vcmp.lt.s32.totalorder %v679, 1
        %vm699 = vcmp.lt.s32.totalorder %v679, 2
        %vm700 = vcmp.lt.s32.totalorder %v679, 3
        %vm701 = vcmp.lt.s32.totalorder %v679, 4
        %v702 = vsel %vm698, %v682, %v685
        %v703 = vsel %vm701, %v691, 2102212464
        %v704 = vsel %vm700, %v688, %v703
        %v705 = vsel %vm699, %v702, %v704
        %v706 = vsel %vm698, %v685, %v688
        %v707 = vsel %vm701, %v694, 920167782
        %v708 = vsel %vm700, %v691, %v707
        %v709 = vsel %vm699, %v706, %v708
        %v710 = vsel %vm698, %v688, %v691
        %v711 = vsel %vm701, %v697, 1326507024
        %v712 = vsel %vm700, %v694, %v711
        %v713 = vsel %vm699, %v710, %v712
        %v714 = vshll.u32 %v674, 8
        %v715 = vmul.u32.u64.compose %v714, %v713
        %v716 = vextract.low.u32 %v715
        %v717 = vextract.high.u32 %v715
        %v718 = vmul.u32.u64.compose %v714, %v709
        %v719 = vextract.low.u32 %v718
        %v720 = vextract.high.u32 %v718
        %v721 = vmul.u32 %v714, %v705
        %v722 = vadd.s32 %v717, %v719
        %vm723 = vc.u32 %v717, %v719
        %v724 = vadd.s32 %v720, 1
        %v725 = vsel %vm723, %v724, %v720
        %v726 = vadd.s32 %v721, %v725
        %v727 = vadd.s32 %v726, 536870912
        %v728 = vshrl.u32 %v727, 30
        %v729 = vshll.u32 %v728, 30
        %v730 = vsub.s32 %v726, %v729
        %vm731 = vcmp.lt.s32.totalorder %v730, 0
        %v732 = vsub.s32 0, %v730
        %v733 = vsel %vm731, %v732, %v730
        %v734 = vclz %v733
        %v735 = vsub.s32 %v734, 2
        %vm736 = vcmp.gt.s32.totalorder 0, %v735
        %v737 = vsel %vm736, 0, %v735
        %v738 = vsub.s32 32, %v737
        %v739 = vshll.u32 %v730, %v737
        %v740 = vshrl.u32 %v722, %v738
        %v741 = vor.u32 %v739, %v740
        %v742 = vsub.s32 4294967266, %v737
        %v743 = vadd.s32 %v742, 127
        %v744 = vshll.u32 %v743, 23
        %v745 = vor.u32 4788187, %v744
        %v746 = vand.u32 2147483647, %v745
        %v748 = vcvt.s32.f32 %v741
        %v749 = vmul.f32 %v748, %v746
        %v750 = vxor.u32 %v749, 2147483648
        %v751 = vsel %vm668, %v750, %v749
        %v752 = vsub.s32 4, %v728
        %v753 = vsel %vm668, %v752, %v728
        %v754 = vsel %vm667, %v561, %v751
        %v755 = vsel %vm667, 0, %v753
        %v756 = vcosq.f32.pop %v754
        %v757 = vsinq.f32.pop %v754
        %vm758 = vweird.f32 %v561
        %v759 = vadd.s32 %v755, 3
        %v760 = vand.u32 %v759, 3
        %vm761 = vcmp.lt.s32.totalorder %v760, 2
        %vm762 = vcmp.eq.s32.totalorder %v760, 0
        %v763 = vxor.u32 %v757, 2147483648
        %v764 = vsel %vm762, %v756, %v763
        %vm765 = vcmp.eq.s32.totalorder %v760, 2
        %v766 = vxor.u32 %v756, 2147483648
        %v767 = vsel %vm765, %v766, %v757
        %v768 = vsel %vm761, %v764, %v767
        %v769 = vsel %vm758, nan, %v768
        %v770 = vmul.f32 %v665, %v665
        %v771 = vmul.f32 %v769, %v769
        %772 = vset.pattern.permute.xlu0 4
        %773 = vperm.xlu0 %772, %v228
        %v774 = vpop.permute.xlu0 %773
        %v776 = vmul.f32 %v774, %v770
        %v777 = vmul.f32 %v774, %v771
        %v778 = vadd.f32 %v552, %v776
        %v779 = vadd.f32 %v554, %v777
        %780 = vset.pattern.permute.xlu0 5
        %781 = vperm.xlu0 %780, %v228
        %v782 = vpop.permute.xlu0 %781
        %784 = vrot.lane.b32.xlu0 %v229, 104
        %v785 = vpop.permute.xlu0 %784
        %vm786 = vcmask 64512
        %v787 = vsel %vm786, %v785, 0
        %789 = vmatprep.subr.mxu0 0.0
        %790 = vmatpush1.msra.mxu0 0.0
        %791 = vmatprep.subr.mxu0 0.0
        %792 = vmatpush1.msra.mxu0 0.0
        %793 = vmatprep.subr.mxu0 0.0
        %794 = vmatpush1.msra.mxu0 0.0
        %795 = vmatprep.subr.mxu0 0.0
        %796 = vmatpush1.msra.mxu0 0.0
        %797 = vmatprep.subr.mxu0 0.0
        %798 = vmatpush1.msra.mxu0 0.0
        %799 = vmatprep.subr.mxu0 0.0
        %800 = vmatpush1.msra.mxu0 0.0
        %801 = vmatprep.subr.mxu0 0.0
        %802 = vmatpush1.msra.mxu0 0.0
        %803 = vmatprep.subr.mxu0 0.0
        %804 = vmatpush1.msra.mxu0 0.0
        %805 = vmatprep.subr.mxu0 0.0
        %806 = vmatpush1.msra.mxu0 0.0
        %807 = vmatprep.subr.mxu0 0.0
        %808 = vmatpush1.msra.mxu0 0.0
        %809 = vmatprep.subr.mxu0 0.0
        %810 = vmatpush1.msra.mxu0 0.0
        %811 = vmatprep.subr.mxu0 0.0
        %812 = vmatpush1.msra.mxu0 0.0
        %813 = vmatprep.subr.mxu0 0.0
        %814 = vmatpush1.msra.mxu0 0.0
        %815 = vmatprep.subr.mxu0 0.0
        %816 = vmatpush1.msra.mxu0 0.0
        %817 = vmatprep.subr.mxu0 0.0
        %818 = vmatpush1.msra.mxu0 0.0
        %819 = vmatprep.subr.mxu0 %v779
        %820 = vmatpush1.msra.mxu0 %v778
        %821 = vmatprep.subr.mxu0 0.0
        %822 = vmatpush2.msra.mxu0 0.0
        %823 = vmatprep.subr.mxu0 0.0
        %824 = vmatpush2.msra.mxu0 0.0
        %825 = vmatprep.subr.mxu0 0.0
        %826 = vmatpush2.msra.mxu0 0.0
        %827 = vmatprep.subr.mxu0 0.0
        %828 = vmatpush2.msra.mxu0 0.0
        %829 = vmatprep.subr.mxu0 0.0
        %830 = vmatpush2.msra.mxu0 0.0
        %831 = vmatprep.subr.mxu0 0.0
        %832 = vmatpush2.msra.mxu0 0.0
        %833 = vmatprep.subr.mxu0 0.0
        %834 = vmatpush2.msra.mxu0 0.0
        %835 = vmatprep.subr.mxu0 0.0
        %836 = vmatpush2.msra.mxu0 0.0
        %837 = vmatprep.subr.mxu0 0.0
        %838 = vmatpush2.msra.mxu0 0.0
        %839 = vmatprep.subr.mxu0 0.0
        %840 = vmatpush2.msra.mxu0 0.0
        %841 = vmatprep.subr.mxu0 0.0
        %842 = vmatpush2.msra.mxu0 0.0
        %843 = vmatprep.subr.mxu0 0.0
        %844 = vmatpush2.msra.mxu0 0.0
        %845 = vmatprep.subr.mxu0 0.0
        %846 = vmatpush2.msra.mxu0 0.0
        %847 = vmatprep.subr.mxu0 0.0
        %848 = vmatpush2.msra.mxu0 0.0
        %849 = vmatprep.subr.mxu0 0.0
        %850 = vmatpush2.msra.mxu0 0.0
        %851 = vmatprep.subr.mxu0 0.0
        %852 = vmatpush2.msra.mxu0 0.0
        %853 = vmatprep.mubr.f32.mxu0 0.0
        %854 = vmatmul.mubr.f32.gmra.mxu0 %v787
        %v855 = vpop.f32.mrf.mxu0
        %v856 = vadd.f32 %v782, %v855
        %v857 = vpop.f32.mrf.mxu0
        %v858 = vadd.f32 %v782, %v857
        %859 = vdwg.mxu0
        %v860 = vadd.f32 %v223, %v856
        %v861 = vadd.f32 %v224, %v858
        %s862 = scalar_lea.vmem %s2, 8
        %v863 = vld [vmem:[%s862] sm:$0xff]
        %864 = vset.pattern.permute.xlu0 6
        %865 = vperm.xlu0 %864, %v228
        %v866 = vpop.permute.xlu0 %865
        %v868 = vmul.f32 %v860, %v866
        %v869 = vmul.f32 %v861, %v866
        %v870 = vand.u32 2147483647, %v868
        %vm871 = vcmp.le.f32.partialorder %v870, 0.7853982
        %vm872 = vcmp.lt.s32.totalorder %v868, 0
        %v873 = vand.u32 %v868, 2139095040
        %v874 = vshrl.u32 %v873, 23
        %v875 = vsub.s32 %v874, 127
        %v876 = vand.u32 2147483647, %v868
        %v877 = vand.u32 %v876, 8388607
        %v878 = vor.u32 %v877, 8388608
        %v879 = vsub.s32 0, %v878
        %v880 = vadd.s32 %v875, 1
        %vm881 = vcmp.gt.s32.totalorder %v880, 0
        %v882 = vsel %vm881, %v880, 0
        %v883 = vshrl.u32 %v882, 5
        %v884 = vand.u32 %v882, 31
        %v885 = vsub.s32 32, %v884
        %v886 = vshrl.u32 683565275, %v885
        %v887 = vshll.u32 683565275, %v884
        %v888 = vshrl.u32 2475754826, %v885
        %v889 = vor.u32 %v887, %v888
        %v890 = vshll.u32 2475754826, %v884
        %v891 = vshrl.u32 2131351028, %v885
        %v892 = vor.u32 %v890, %v891
        %v893 = vshll.u32 2131351028, %v884
        %v894 = vshrl.u32 2102212464, %v885
        %v895 = vor.u32 %v893, %v894
        %v896 = vshll.u32 2102212464, %v884
        %v897 = vshrl.u32 920167782, %v885
        %v898 = vor.u32 %v896, %v897
        %v899 = vshll.u32 920167782, %v884
        %v900 = vshrl.u32 1326507024, %v885
        %v901 = vor.u32 %v899, %v900
        %vm902 = vcmp.lt.s32.totalorder %v883, 1
        %vm903 = vcmp.lt.s32.totalorder %v883, 2
        %vm904 = vcmp.lt.s32.totalorder %v883, 3
        %vm905 = vcmp.lt.s32.totalorder %v883, 4
        %v906 = vsel %vm902, %v886, %v889
        %v907 = vsel %vm905, %v895, 2102212464
        %v908 = vsel %vm904, %v892, %v907
        %v909 = vsel %vm903, %v906, %v908
        %v910 = vsel %vm902, %v889, %v892
        %v911 = vsel %vm905, %v898, 920167782
        %v912 = vsel %vm904, %v895, %v911
        %v913 = vsel %vm903, %v910, %v912
        %v914 = vsel %vm902, %v892, %v895
        %v915 = vsel %vm905, %v901, 1326507024
        %v916 = vsel %vm904, %v898, %v915
        %v917 = vsel %vm903, %v914, %v916
        %v918 = vshll.u32 %v878, 8
        %v919 = vmul.u32.u64.compose %v918, %v917
        %v920 = vextract.low.u32 %v919
        %v921 = vextract.high.u32 %v919
        %v922 = vmul.u32.u64.compose %v918, %v913
        %v923 = vextract.low.u32 %v922
        %v924 = vextract.high.u32 %v922
        %v925 = vmul.u32 %v918, %v909
        %v926 = vadd.s32 %v921, %v923
        %vm927 = vc.u32 %v921, %v923
        %v928 = vadd.s32 %v924, 1
        %v929 = vsel %vm927, %v928, %v924
        %v930 = vadd.s32 %v925, %v929
        %v931 = vadd.s32 %v930, 536870912
        %v932 = vshrl.u32 %v931, 30
        %v933 = vshll.u32 %v932, 30
        %v934 = vsub.s32 %v930, %v933
        %vm935 = vcmp.lt.s32.totalorder %v934, 0
        %v936 = vsub.s32 0, %v934
        %v937 = vsel %vm935, %v936, %v934
        %v938 = vclz %v937
        %v939 = vsub.s32 %v938, 2
        %vm940 = vcmp.gt.s32.totalorder 0, %v939
        %v941 = vsel %vm940, 0, %v939
        %v942 = vsub.s32 32, %v941
        %v943 = vshll.u32 %v934, %v941
        %v944 = vshrl.u32 %v926, %v942
        %v945 = vor.u32 %v943, %v944
        %v946 = vsub.s32 4294967266, %v941
        %v947 = vadd.s32 %v946, 127
        %v948 = vshll.u32 %v947, 23
        %v949 = vor.u32 4788187, %v948
        %v950 = vand.u32 2147483647, %v949
        %v952 = vcvt.s32.f32 %v945
        %v953 = vmul.f32 %v952, %v950
        %v954 = vxor.u32 %v953, 2147483648
        %v955 = vsel %vm872, %v954, %v953
        %v956 = vsub.s32 4, %v932
        %v957 = vsel %vm872, %v956, %v932
        %v958 = vsel %vm871, %v868, %v955
        %v959 = vsel %vm871, 0, %v957
        %v960 = vcosq.f32.pop %v958
        %v961 = vsinq.f32.pop %v958
        %vm962 = vweird.f32 %v868
        %v963 = vadd.s32 %v959, 3
        %v964 = vand.u32 %v963, 3
        %vm965 = vcmp.lt.s32.totalorder %v964, 2
        %vm966 = vcmp.eq.s32.totalorder %v964, 0
        %v967 = vxor.u32 %v961, 2147483648
        %v968 = vsel %vm966, %v960, %v967
        %vm969 = vcmp.eq.s32.totalorder %v964, 2
        %v970 = vxor.u32 %v960, 2147483648
        %v971 = vsel %vm969, %v970, %v961
        %v972 = vsel %vm965, %v968, %v971
        %v973 = vsel %vm962, nan, %v972
        %v974 = vand.u32 2147483647, %v869
        %vm975 = vcmp.le.f32.partialorder %v974, 0.7853982
        %vm976 = vcmp.lt.s32.totalorder %v869, 0
        %v977 = vand.u32 %v869, 2139095040
        %v978 = vshrl.u32 %v977, 23
        %v979 = vsub.s32 %v978, 127
        %v980 = vand.u32 2147483647, %v869
        %v981 = vand.u32 %v980, 8388607
        %v982 = vor.u32 %v981, 8388608
        %v983 = vsub.s32 0, %v982
        %v984 = vadd.s32 %v979, 1
        %vm985 = vcmp.gt.s32.totalorder %v984, 0
        %v986 = vsel %vm985, %v984, 0
        %v987 = vshrl.u32 %v986, 5
        %v988 = vand.u32 %v986, 31
        %v989 = vsub.s32 32, %v988
        %v990 = vshrl.u32 683565275, %v989
        %v991 = vshll.u32 683565275, %v988
        %v992 = vshrl.u32 2475754826, %v989
        %v993 = vor.u32 %v991, %v992
        %v994 = vshll.u32 2475754826, %v988
        %v995 = vshrl.u32 2131351028, %v989
        %v996 = vor.u32 %v994, %v995
        %v997 = vshll.u32 2131351028, %v988
        %v998 = vshrl.u32 2102212464, %v989
        %v999 = vor.u32 %v997, %v998
        %v1000 = vshll.u32 2102212464, %v988
        %v1001 = vshrl.u32 920167782, %v989
        %v1002 = vor.u32 %v1000, %v1001
        %v1003 = vshll.u32 920167782, %v988
        %v1004 = vshrl.u32 1326507024, %v989
        %v1005 = vor.u32 %v1003, %v1004
        %vm1006 = vcmp.lt.s32.totalorder %v987, 1
        %vm1007 = vcmp.lt.s32.totalorder %v987, 2
        %vm1008 = vcmp.lt.s32.totalorder %v987, 3
        %vm1009 = vcmp.lt.s32.totalorder %v987, 4
        %v1010 = vsel %vm1006, %v990, %v993
        %v1011 = vsel %vm1009, %v999, 2102212464
        %v1012 = vsel %vm1008, %v996, %v1011
        %v1013 = vsel %vm1007, %v1010, %v1012
        %v1014 = vsel %vm1006, %v993, %v996
        %v1015 = vsel %vm1009, %v1002, 920167782
        %v1016 = vsel %vm1008, %v999, %v1015
        %v1017 = vsel %vm1007, %v1014, %v1016
        %v1018 = vsel %vm1006, %v996, %v999
        %v1019 = vsel %vm1009, %v1005, 1326507024
        %v1020 = vsel %vm1008, %v1002, %v1019
        %v1021 = vsel %vm1007, %v1018, %v1020
        %v1022 = vshll.u32 %v982, 8
        %v1023 = vmul.u32.u64.compose %v1022, %v1021
        %v1024 = vextract.low.u32 %v1023
        %v1025 = vextract.high.u32 %v1023
        %v1026 = vmul.u32.u64.compose %v1022, %v1017
        %v1027 = vextract.low.u32 %v1026
        %v1028 = vextract.high.u32 %v1026
        %v1029 = vmul.u32 %v1022, %v1013
        %v1030 = vadd.s32 %v1025, %v1027
        %vm1031 = vc.u32 %v1025, %v1027
        %v1032 = vadd.s32 %v1028, 1
        %v1033 = vsel %vm1031, %v1032, %v1028
        %v1034 = vadd.s32 %v1029, %v1033
        %v1035 = vadd.s32 %v1034, 536870912
        %v1036 = vshrl.u32 %v1035, 30
        %v1037 = vshll.u32 %v1036, 30
        %v1038 = vsub.s32 %v1034, %v1037
        %vm1039 = vcmp.lt.s32.totalorder %v1038, 0
        %v1040 = vsub.s32 0, %v1038
        %v1041 = vsel %vm1039, %v1040, %v1038
        %v1042 = vclz %v1041
        %v1043 = vsub.s32 %v1042, 2
        %vm1044 = vcmp.gt.s32.totalorder 0, %v1043
        %v1045 = vsel %vm1044, 0, %v1043
        %v1046 = vsub.s32 32, %v1045
        %v1047 = vshll.u32 %v1038, %v1045
        %v1048 = vshrl.u32 %v1030, %v1046
        %v1049 = vor.u32 %v1047, %v1048
        %v1050 = vsub.s32 4294967266, %v1045
        %v1051 = vadd.s32 %v1050, 127
        %v1052 = vshll.u32 %v1051, 23
        %v1053 = vor.u32 4788187, %v1052
        %v1054 = vand.u32 2147483647, %v1053
        %v1056 = vcvt.s32.f32 %v1049
        %v1057 = vmul.f32 %v1056, %v1054
        %v1058 = vxor.u32 %v1057, 2147483648
        %v1059 = vsel %vm976, %v1058, %v1057
        %v1060 = vsub.s32 4, %v1036
        %v1061 = vsel %vm976, %v1060, %v1036
        %v1062 = vsel %vm975, %v869, %v1059
        %v1063 = vsel %vm975, 0, %v1061
        %v1064 = vcosq.f32.pop %v1062
        %v1065 = vsinq.f32.pop %v1062
        %vm1066 = vweird.f32 %v869
        %v1067 = vadd.s32 %v1063, 3
        %v1068 = vand.u32 %v1067, 3
        %vm1069 = vcmp.lt.s32.totalorder %v1068, 2
        %vm1070 = vcmp.eq.s32.totalorder %v1068, 0
        %v1071 = vxor.u32 %v1065, 2147483648
        %v1072 = vsel %vm1070, %v1064, %v1071
        %vm1073 = vcmp.eq.s32.totalorder %v1068, 2
        %v1074 = vxor.u32 %v1064, 2147483648
        %v1075 = vsel %vm1073, %v1074, %v1065
        %v1076 = vsel %vm1069, %v1072, %v1075
        %v1077 = vsel %vm1066, nan, %v1076
        %v1078 = vmul.f32 %v973, %v973
        %v1079 = vmul.f32 %v1077, %v1077
        %1080 = vset.pattern.permute.xlu0 7
        %1081 = vperm.xlu0 %1080, %v228
        %v1082 = vpop.permute.xlu0 %1081
        %v1084 = vmul.f32 %v1082, %v1078
        %v1085 = vmul.f32 %v1082, %v1079
        %v1086 = vadd.f32 %v860, %v1084
        %v1087 = vadd.f32 %v861, %v1085
        %1088 = vrot.lane.b32.xlu0 %v1086, 1
        %v1089 = vpop.permute.xlu0 %1088
        %1090 = vrot.lane.b32.xlu0 %v1087, 1
        %v1091 = vpop.permute.xlu0 %1090
        %v1092 = vsel %vm459, %v1089, %v1091
        %v1093 = vsel %vm459, %v1091, %v1089
        %v1094 = vsel %vm462, %v1093, 0.0
        %v1095 = vsel %vm463, %v1092, 0.0
        %1096 = vrot.lane.b32.xlu0 %v1086, 127
        %v1097 = vpop.permute.xlu0 %1096
        %1098 = vrot.lane.b32.xlu0 %v1087, 127
        %v1099 = vpop.permute.xlu0 %1098
        %v1100 = vsel %vm470, %v1097, %v1099
        %v1101 = vsel %vm470, %v1099, %v1097
        %v1102 = vsel %vm473, %v1100, 0.0
        %v1103 = vsel %vm474, %v1101, 0.0
        %1104 = vset.pattern.permute.xlu0 8
        %1105 = vperm.xlu0 %1104, %v228
        %v1106 = vpop.permute.xlu0 %1105
        %v1109 = vsel %vm481, %v863, 0
        %1111 = vmatprep.subr.mxu0 0.0
        %1112 = vmatpush1.msra.mxu0 0.0
        %1113 = vmatprep.subr.mxu0 0.0
        %1114 = vmatpush1.msra.mxu0 0.0
        %1115 = vmatprep.subr.mxu0 0.0
        %1116 = vmatpush1.msra.mxu0 0.0
        %1117 = vmatprep.subr.mxu0 0.0
        %1118 = vmatpush1.msra.mxu0 0.0
        %1119 = vmatprep.subr.mxu0 0.0
        %1120 = vmatpush1.msra.mxu0 0.0
        %1121 = vmatprep.subr.mxu0 0.0
        %1122 = vmatpush1.msra.mxu0 0.0
        %1123 = vmatprep.subr.mxu0 0.0
        %1124 = vmatpush1.msra.mxu0 0.0
        %1125 = vmatprep.subr.mxu0 0.0
        %1126 = vmatpush1.msra.mxu0 0.0
        %1127 = vmatprep.subr.mxu0 0.0
        %1128 = vmatpush1.msra.mxu0 0.0
        %1129 = vmatprep.subr.mxu0 0.0
        %1130 = vmatpush1.msra.mxu0 0.0
        %1131 = vmatprep.subr.mxu0 0.0
        %1132 = vmatpush1.msra.mxu0 0.0
        %1133 = vmatprep.subr.mxu0 0.0
        %1134 = vmatpush1.msra.mxu0 0.0
        %1135 = vmatprep.subr.mxu0 0.0
        %1136 = vmatpush1.msra.mxu0 0.0
        %1137 = vmatprep.subr.mxu0 %v1103
        %1138 = vmatpush1.msra.mxu0 %v1102
        %1139 = vmatprep.subr.mxu0 %v1087
        %1140 = vmatpush1.msra.mxu0 %v1086
        %1141 = vmatprep.subr.mxu0 %v1095
        %1142 = vmatpush1.msra.mxu0 %v1094
        %1143 = vmatprep.subr.mxu0 0.0
        %1144 = vmatpush2.msra.mxu0 0.0
        %1145 = vmatprep.subr.mxu0 0.0
        %1146 = vmatpush2.msra.mxu0 0.0
        %1147 = vmatprep.subr.mxu0 0.0
        %1148 = vmatpush2.msra.mxu0 0.0
        %1149 = vmatprep.subr.mxu0 0.0
        %1150 = vmatpush2.msra.mxu0 0.0
        %1151 = vmatprep.subr.mxu0 0.0
        %1152 = vmatpush2.msra.mxu0 0.0
        %1153 = vmatprep.subr.mxu0 0.0
        %1154 = vmatpush2.msra.mxu0 0.0
        %1155 = vmatprep.subr.mxu0 0.0
        %1156 = vmatpush2.msra.mxu0 0.0
        %1157 = vmatprep.subr.mxu0 0.0
        %1158 = vmatpush2.msra.mxu0 0.0
        %1159 = vmatprep.subr.mxu0 0.0
        %1160 = vmatpush2.msra.mxu0 0.0
        %1161 = vmatprep.subr.mxu0 0.0
        %1162 = vmatpush2.msra.mxu0 0.0
        %1163 = vmatprep.subr.mxu0 0.0
        %1164 = vmatpush2.msra.mxu0 0.0
        %1165 = vmatprep.subr.mxu0 0.0
        %1166 = vmatpush2.msra.mxu0 0.0
        %1167 = vmatprep.subr.mxu0 0.0
        %1168 = vmatpush2.msra.mxu0 0.0
        %1169 = vmatprep.subr.mxu0 0.0
        %1170 = vmatpush2.msra.mxu0 0.0
        %1171 = vmatprep.subr.mxu0 0.0
        %1172 = vmatpush2.msra.mxu0 0.0
        %1173 = vmatprep.subr.mxu0 0.0
        %1174 = vmatpush2.msra.mxu0 0.0
        %1175 = vmatprep.mubr.f32.mxu0 0.0
        %1176 = vmatmul.mubr.f32.gmra.mxu0 %v1109
        %v1177 = vpop.f32.mrf.mxu0
        %v1178 = vadd.f32 %v1106, %v1177
        %v1179 = vpop.f32.mrf.mxu0
        %v1180 = vadd.f32 %v1106, %v1179
        %1181 = vdwg.mxu0
        %1182 = vset.pattern.permute.xlu0 9
        %1183 = vperm.xlu0 %1182, %v228
        %v1184 = vpop.permute.xlu0 %1183
        %v1186 = vmul.f32 %v1178, %v1184
        %v1187 = vmul.f32 %v1180, %v1184
        %v1188 = vand.u32 2147483647, %v1186
        %vm1189 = vcmp.le.f32.partialorder %v1188, 0.7853982
        %vm1190 = vcmp.lt.s32.totalorder %v1186, 0
        %v1191 = vand.u32 %v1186, 2139095040
        %v1192 = vshrl.u32 %v1191, 23
        %v1193 = vsub.s32 %v1192, 127
        %v1194 = vand.u32 2147483647, %v1186
        %v1195 = vand.u32 %v1194, 8388607
        %v1196 = vor.u32 %v1195, 8388608
        %v1197 = vsub.s32 0, %v1196
        %v1198 = vadd.s32 %v1193, 1
        %vm1199 = vcmp.gt.s32.totalorder %v1198, 0
        %v1200 = vsel %vm1199, %v1198, 0
        %v1201 = vshrl.u32 %v1200, 5
        %v1202 = vand.u32 %v1200, 31
        %v1203 = vsub.s32 32, %v1202
        %v1204 = vshrl.u32 683565275, %v1203
        %v1205 = vshll.u32 683565275, %v1202
        %v1206 = vshrl.u32 2475754826, %v1203
        %v1207 = vor.u32 %v1205, %v1206
        %v1208 = vshll.u32 2475754826, %v1202
        %v1209 = vshrl.u32 2131351028, %v1203
        %v1210 = vor.u32 %v1208, %v1209
        %v1211 = vshll.u32 2131351028, %v1202
        %v1212 = vshrl.u32 2102212464, %v1203
        %v1213 = vor.u32 %v1211, %v1212
        %v1214 = vshll.u32 2102212464, %v1202
        %v1215 = vshrl.u32 920167782, %v1203
        %v1216 = vor.u32 %v1214, %v1215
        %v1217 = vshll.u32 920167782, %v1202
        %v1218 = vshrl.u32 1326507024, %v1203
        %v1219 = vor.u32 %v1217, %v1218
        %vm1220 = vcmp.lt.s32.totalorder %v1201, 1
        %vm1221 = vcmp.lt.s32.totalorder %v1201, 2
        %vm1222 = vcmp.lt.s32.totalorder %v1201, 3
        %vm1223 = vcmp.lt.s32.totalorder %v1201, 4
        %v1224 = vsel %vm1220, %v1204, %v1207
        %v1225 = vsel %vm1223, %v1213, 2102212464
        %v1226 = vsel %vm1222, %v1210, %v1225
        %v1227 = vsel %vm1221, %v1224, %v1226
        %v1228 = vsel %vm1220, %v1207, %v1210
        %v1229 = vsel %vm1223, %v1216, 920167782
        %v1230 = vsel %vm1222, %v1213, %v1229
        %v1231 = vsel %vm1221, %v1228, %v1230
        %v1232 = vsel %vm1220, %v1210, %v1213
        %v1233 = vsel %vm1223, %v1219, 1326507024
        %v1234 = vsel %vm1222, %v1216, %v1233
        %v1235 = vsel %vm1221, %v1232, %v1234
        %v1236 = vshll.u32 %v1196, 8
        %v1237 = vmul.u32.u64.compose %v1236, %v1235
        %v1238 = vextract.low.u32 %v1237
        %v1239 = vextract.high.u32 %v1237
        %v1240 = vmul.u32.u64.compose %v1236, %v1231
        %v1241 = vextract.low.u32 %v1240
        %v1242 = vextract.high.u32 %v1240
        %v1243 = vmul.u32 %v1236, %v1227
        %v1244 = vadd.s32 %v1239, %v1241
        %vm1245 = vc.u32 %v1239, %v1241
        %v1246 = vadd.s32 %v1242, 1
        %v1247 = vsel %vm1245, %v1246, %v1242
        %v1248 = vadd.s32 %v1243, %v1247
        %v1249 = vadd.s32 %v1248, 536870912
        %v1250 = vshrl.u32 %v1249, 30
        %v1251 = vshll.u32 %v1250, 30
        %v1252 = vsub.s32 %v1248, %v1251
        %vm1253 = vcmp.lt.s32.totalorder %v1252, 0
        %v1254 = vsub.s32 0, %v1252
        %v1255 = vsel %vm1253, %v1254, %v1252
        %v1256 = vclz %v1255
        %v1257 = vsub.s32 %v1256, 2
        %vm1258 = vcmp.gt.s32.totalorder 0, %v1257
        %v1259 = vsel %vm1258, 0, %v1257
        %v1260 = vsub.s32 32, %v1259
        %v1261 = vshll.u32 %v1252, %v1259
        %v1262 = vshrl.u32 %v1244, %v1260
        %v1263 = vor.u32 %v1261, %v1262
        %v1264 = vsub.s32 4294967266, %v1259
        %v1265 = vadd.s32 %v1264, 127
        %v1266 = vshll.u32 %v1265, 23
        %v1267 = vor.u32 4788187, %v1266
        %v1268 = vand.u32 2147483647, %v1267
        %v1270 = vcvt.s32.f32 %v1263
        %v1271 = vmul.f32 %v1270, %v1268
        %v1272 = vxor.u32 %v1271, 2147483648
        %v1273 = vsel %vm1190, %v1272, %v1271
        %v1274 = vsub.s32 4, %v1250
        %v1275 = vsel %vm1190, %v1274, %v1250
        %v1276 = vsel %vm1189, %v1186, %v1273
        %v1277 = vsel %vm1189, 0, %v1275
        %v1278 = vcosq.f32.pop %v1276
        %v1279 = vsinq.f32.pop %v1276
        %vm1280 = vweird.f32 %v1186
        %v1281 = vadd.s32 %v1277, 3
        %v1282 = vand.u32 %v1281, 3
        %vm1283 = vcmp.lt.s32.totalorder %v1282, 2
        %vm1284 = vcmp.eq.s32.totalorder %v1282, 0
        %v1285 = vxor.u32 %v1279, 2147483648
        %v1286 = vsel %vm1284, %v1278, %v1285
        %vm1287 = vcmp.eq.s32.totalorder %v1282, 2
        %v1288 = vxor.u32 %v1278, 2147483648
        %v1289 = vsel %vm1287, %v1288, %v1279
        %v1290 = vsel %vm1283, %v1286, %v1289
        %v1291 = vsel %vm1280, nan, %v1290
        %v1292 = vand.u32 2147483647, %v1187
        %vm1293 = vcmp.le.f32.partialorder %v1292, 0.7853982
        %vm1294 = vcmp.lt.s32.totalorder %v1187, 0
        %v1295 = vand.u32 %v1187, 2139095040
        %v1296 = vshrl.u32 %v1295, 23
        %v1297 = vsub.s32 %v1296, 127
        %v1298 = vand.u32 2147483647, %v1187
        %v1299 = vand.u32 %v1298, 8388607
        %v1300 = vor.u32 %v1299, 8388608
        %v1301 = vsub.s32 0, %v1300
        %v1302 = vadd.s32 %v1297, 1
        %vm1303 = vcmp.gt.s32.totalorder %v1302, 0
        %v1304 = vsel %vm1303, %v1302, 0
        %v1305 = vshrl.u32 %v1304, 5
        %v1306 = vand.u32 %v1304, 31
        %v1307 = vsub.s32 32, %v1306
        %v1308 = vshrl.u32 683565275, %v1307
        %v1309 = vshll.u32 683565275, %v1306
        %v1310 = vshrl.u32 2475754826, %v1307
        %v1311 = vor.u32 %v1309, %v1310
        %v1312 = vshll.u32 2475754826, %v1306
        %v1313 = vshrl.u32 2131351028, %v1307
        %v1314 = vor.u32 %v1312, %v1313
        %v1315 = vshll.u32 2131351028, %v1306
        %v1316 = vshrl.u32 2102212464, %v1307
        %v1317 = vor.u32 %v1315, %v1316
        %v1318 = vshll.u32 2102212464, %v1306
        %v1319 = vshrl.u32 920167782, %v1307
        %v1320 = vor.u32 %v1318, %v1319
        %v1321 = vshll.u32 920167782, %v1306
        %v1322 = vshrl.u32 1326507024, %v1307
        %v1323 = vor.u32 %v1321, %v1322
        %vm1324 = vcmp.lt.s32.totalorder %v1305, 1
        %vm1325 = vcmp.lt.s32.totalorder %v1305, 2
        %vm1326 = vcmp.lt.s32.totalorder %v1305, 3
        %vm1327 = vcmp.lt.s32.totalorder %v1305, 4
        %v1328 = vsel %vm1324, %v1308, %v1311
        %v1329 = vsel %vm1327, %v1317, 2102212464
        %v1330 = vsel %vm1326, %v1314, %v1329
        %v1331 = vsel %vm1325, %v1328, %v1330
        %v1332 = vsel %vm1324, %v1311, %v1314
        %v1333 = vsel %vm1327, %v1320, 920167782
        %v1334 = vsel %vm1326, %v1317, %v1333
        %v1335 = vsel %vm1325, %v1332, %v1334
        %v1336 = vsel %vm1324, %v1314, %v1317
        %v1337 = vsel %vm1327, %v1323, 1326507024
        %v1338 = vsel %vm1326, %v1320, %v1337
        %v1339 = vsel %vm1325, %v1336, %v1338
        %v1340 = vshll.u32 %v1300, 8
        %v1341 = vmul.u32.u64.compose %v1340, %v1339
        %v1342 = vextract.low.u32 %v1341
        %v1343 = vextract.high.u32 %v1341
        %v1344 = vmul.u32.u64.compose %v1340, %v1335
        %v1345 = vextract.low.u32 %v1344
        %v1346 = vextract.high.u32 %v1344
        %v1347 = vmul.u32 %v1340, %v1331
        %v1348 = vadd.s32 %v1343, %v1345
        %vm1349 = vc.u32 %v1343, %v1345
        %v1350 = vadd.s32 %v1346, 1
        %v1351 = vsel %vm1349, %v1350, %v1346
        %v1352 = vadd.s32 %v1347, %v1351
        %v1353 = vadd.s32 %v1352, 536870912
        %v1354 = vshrl.u32 %v1353, 30
        %v1355 = vshll.u32 %v1354, 30
        %v1356 = vsub.s32 %v1352, %v1355
        %vm1357 = vcmp.lt.s32.totalorder %v1356, 0
        %v1358 = vsub.s32 0, %v1356
        %v1359 = vsel %vm1357, %v1358, %v1356
        %v1360 = vclz %v1359
        %v1361 = vsub.s32 %v1360, 2
        %vm1362 = vcmp.gt.s32.totalorder 0, %v1361
        %v1363 = vsel %vm1362, 0, %v1361
        %v1364 = vsub.s32 32, %v1363
        %v1365 = vshll.u32 %v1356, %v1363
        %v1366 = vshrl.u32 %v1348, %v1364
        %v1367 = vor.u32 %v1365, %v1366
        %v1368 = vsub.s32 4294967266, %v1363
        %v1369 = vadd.s32 %v1368, 127
        %v1370 = vshll.u32 %v1369, 23
        %v1371 = vor.u32 4788187, %v1370
        %v1372 = vand.u32 2147483647, %v1371
        %v1374 = vcvt.s32.f32 %v1367
        %v1375 = vmul.f32 %v1374, %v1372
        %v1376 = vxor.u32 %v1375, 2147483648
        %v1377 = vsel %vm1294, %v1376, %v1375
        %v1378 = vsub.s32 4, %v1354
        %v1379 = vsel %vm1294, %v1378, %v1354
        %v1380 = vsel %vm1293, %v1187, %v1377
        %v1381 = vsel %vm1293, 0, %v1379
        %v1382 = vcosq.f32.pop %v1380
        %v1383 = vsinq.f32.pop %v1380
        %vm1384 = vweird.f32 %v1187
        %v1385 = vadd.s32 %v1381, 3
        %v1386 = vand.u32 %v1385, 3
        %vm1387 = vcmp.lt.s32.totalorder %v1386, 2
        %vm1388 = vcmp.eq.s32.totalorder %v1386, 0
        %v1389 = vxor.u32 %v1383, 2147483648
        %v1390 = vsel %vm1388, %v1382, %v1389
        %vm1391 = vcmp.eq.s32.totalorder %v1386, 2
        %v1392 = vxor.u32 %v1382, 2147483648
        %v1393 = vsel %vm1391, %v1392, %v1383
        %v1394 = vsel %vm1387, %v1390, %v1393
        %v1395 = vsel %vm1384, nan, %v1394
        %v1396 = vmul.f32 %v1291, %v1291
        %v1397 = vmul.f32 %v1395, %v1395
        %1398 = vset.pattern.permute.xlu0 10
        %1399 = vperm.xlu0 %1398, %v228
        %v1400 = vpop.permute.xlu0 %1399
        %v1402 = vmul.f32 %v1400, %v1396
        %v1403 = vmul.f32 %v1400, %v1397
        %v1404 = vadd.f32 %v1178, %v1402
        %v1405 = vadd.f32 %v1180, %v1403
        %1406 = vset.pattern.permute.xlu0 11
        %1407 = vperm.xlu0 %1406, %v228
        %v1408 = vpop.permute.xlu0 %1407
        %1410 = vrot.lane.b32.xlu0 %v863, 104
        %v1411 = vpop.permute.xlu0 %1410
        %v1412 = vsel %vm786, %v1411, 0
        %1414 = vmatprep.subr.mxu0 0.0
        %1415 = vmatpush1.msra.mxu0 0.0
        %1416 = vmatprep.subr.mxu0 0.0
        %1417 = vmatpush1.msra.mxu0 0.0
        %1418 = vmatprep.subr.mxu0 0.0
        %1419 = vmatpush1.msra.mxu0 0.0
        %1420 = vmatprep.subr.mxu0 0.0
        %1421 = vmatpush1.msra.mxu0 0.0
        %1422 = vmatprep.subr.mxu0 0.0
        %1423 = vmatpush1.msra.mxu0 0.0
        %1424 = vmatprep.subr.mxu0 0.0
        %1425 = vmatpush1.msra.mxu0 0.0
        %1426 = vmatprep.subr.mxu0 0.0
        %1427 = vmatpush1.msra.mxu0 0.0
        %1428 = vmatprep.subr.mxu0 0.0
        %1429 = vmatpush1.msra.mxu0 0.0
        %1430 = vmatprep.subr.mxu0 0.0
        %1431 = vmatpush1.msra.mxu0 0.0
        %1432 = vmatprep.subr.mxu0 0.0
        %1433 = vmatpush1.msra.mxu0 0.0
        %1434 = vmatprep.subr.mxu0 0.0
        %1435 = vmatpush1.msra.mxu0 0.0
        %1436 = vmatprep.subr.mxu0 0.0
        %1437 = vmatpush1.msra.mxu0 0.0
        %1438 = vmatprep.subr.mxu0 0.0
        %1439 = vmatpush1.msra.mxu0 0.0
        %1440 = vmatprep.subr.mxu0 0.0
        %1441 = vmatpush1.msra.mxu0 0.0
        %1442 = vmatprep.subr.mxu0 0.0
        %1443 = vmatpush1.msra.mxu0 0.0
        %1444 = vmatprep.subr.mxu0 %v1405
        %1445 = vmatpush1.msra.mxu0 %v1404
        %1446 = vmatprep.subr.mxu0 0.0
        %1447 = vmatpush2.msra.mxu0 0.0
        %1448 = vmatprep.subr.mxu0 0.0
        %1449 = vmatpush2.msra.mxu0 0.0
        %1450 = vmatprep.subr.mxu0 0.0
        %1451 = vmatpush2.msra.mxu0 0.0
        %1452 = vmatprep.subr.mxu0 0.0
        %1453 = vmatpush2.msra.mxu0 0.0
        %1454 = vmatprep.subr.mxu0 0.0
        %1455 = vmatpush2.msra.mxu0 0.0
        %1456 = vmatprep.subr.mxu0 0.0
        %1457 = vmatpush2.msra.mxu0 0.0
        %1458 = vmatprep.subr.mxu0 0.0
        %1459 = vmatpush2.msra.mxu0 0.0
        %1460 = vmatprep.subr.mxu0 0.0
        %1461 = vmatpush2.msra.mxu0 0.0
        %1462 = vmatprep.subr.mxu0 0.0
        %1463 = vmatpush2.msra.mxu0 0.0
        %1464 = vmatprep.subr.mxu0 0.0
        %1465 = vmatpush2.msra.mxu0 0.0
        %1466 = vmatprep.subr.mxu0 0.0
        %1467 = vmatpush2.msra.mxu0 0.0
        %1468 = vmatprep.subr.mxu0 0.0
        %1469 = vmatpush2.msra.mxu0 0.0
        %1470 = vmatprep.subr.mxu0 0.0
        %1471 = vmatpush2.msra.mxu0 0.0
        %1472 = vmatprep.subr.mxu0 0.0
        %1473 = vmatpush2.msra.mxu0 0.0
        %1474 = vmatprep.subr.mxu0 0.0
        %1475 = vmatpush2.msra.mxu0 0.0
        %1476 = vmatprep.subr.mxu0 0.0
        %1477 = vmatpush2.msra.mxu0 0.0
        %1478 = vmatprep.mubr.f32.mxu0 0.0
        %1479 = vmatmul.mubr.f32.gmra.mxu0 %v1412
        %v1480 = vpop.f32.mrf.mxu0
        %v1481 = vadd.f32 %v1408, %v1480
        %v1482 = vpop.f32.mrf.mxu0
        %v1483 = vadd.f32 %v1408, %v1482
        %1484 = vdwg.mxu0
        %v1485 = vadd.f32 %v860, %v1481
        %v1486 = vadd.f32 %v861, %v1483
        %1487 = vset.pattern.permute.xlu0 12
        %1488 = vperm.xlu0 %1487, %v228
        %v1489 = vpop.permute.xlu0 %1488
        %v1491 = vmul.f32 %v1485, %v1489
        %v1492 = vmul.f32 %v1486, %v1489
        %v1493 = vand.u32 2147483647, %v1491
        %vm1494 = vcmp.le.f32.partialorder %v1493, 0.7853982
        %vm1495 = vcmp.lt.s32.totalorder %v1491, 0
        %v1496 = vand.u32 %v1491, 2139095040
        %v1497 = vshrl.u32 %v1496, 23
        %v1498 = vsub.s32 %v1497, 127
        %v1499 = vand.u32 2147483647, %v1491
        %v1500 = vand.u32 %v1499, 8388607
        %v1501 = vor.u32 %v1500, 8388608
        %v1502 = vsub.s32 0, %v1501
        %v1503 = vadd.s32 %v1498, 1
        %vm1504 = vcmp.gt.s32.totalorder %v1503, 0
        %v1505 = vsel %vm1504, %v1503, 0
        %v1506 = vshrl.u32 %v1505, 5
        %v1507 = vand.u32 %v1505, 31
        %v1508 = vsub.s32 32, %v1507
        %v1509 = vshrl.u32 683565275, %v1508
        %v1510 = vshll.u32 683565275, %v1507
        %v1511 = vshrl.u32 2475754826, %v1508
        %v1512 = vor.u32 %v1510, %v1511
        %v1513 = vshll.u32 2475754826, %v1507
        %v1514 = vshrl.u32 2131351028, %v1508
        %v1515 = vor.u32 %v1513, %v1514
        %v1516 = vshll.u32 2131351028, %v1507
        %v1517 = vshrl.u32 2102212464, %v1508
        %v1518 = vor.u32 %v1516, %v1517
        %v1519 = vshll.u32 2102212464, %v1507
        %v1520 = vshrl.u32 920167782, %v1508
        %v1521 = vor.u32 %v1519, %v1520
        %v1522 = vshll.u32 920167782, %v1507
        %v1523 = vshrl.u32 1326507024, %v1508
        %v1524 = vor.u32 %v1522, %v1523
        %vm1525 = vcmp.lt.s32.totalorder %v1506, 1
        %vm1526 = vcmp.lt.s32.totalorder %v1506, 2
        %vm1527 = vcmp.lt.s32.totalorder %v1506, 3
        %vm1528 = vcmp.lt.s32.totalorder %v1506, 4
        %v1529 = vsel %vm1525, %v1509, %v1512
        %v1530 = vsel %vm1528, %v1518, 2102212464
        %v1531 = vsel %vm1527, %v1515, %v1530
        %v1532 = vsel %vm1526, %v1529, %v1531
        %v1533 = vsel %vm1525, %v1512, %v1515
        %v1534 = vsel %vm1528, %v1521, 920167782
        %v1535 = vsel %vm1527, %v1518, %v1534
        %v1536 = vsel %vm1526, %v1533, %v1535
        %v1537 = vsel %vm1525, %v1515, %v1518
        %v1538 = vsel %vm1528, %v1524, 1326507024
        %v1539 = vsel %vm1527, %v1521, %v1538
        %v1540 = vsel %vm1526, %v1537, %v1539
        %v1541 = vshll.u32 %v1501, 8
        %v1542 = vmul.u32.u64.compose %v1541, %v1540
        %v1543 = vextract.low.u32 %v1542
        %v1544 = vextract.high.u32 %v1542
        %v1545 = vmul.u32.u64.compose %v1541, %v1536
        %v1546 = vextract.low.u32 %v1545
        %v1547 = vextract.high.u32 %v1545
        %v1548 = vmul.u32 %v1541, %v1532
        %v1549 = vadd.s32 %v1544, %v1546
        %vm1550 = vc.u32 %v1544, %v1546
        %v1551 = vadd.s32 %v1547, 1
        %v1552 = vsel %vm1550, %v1551, %v1547
        %v1553 = vadd.s32 %v1548, %v1552
        %v1554 = vadd.s32 %v1553, 536870912
        %v1555 = vshrl.u32 %v1554, 30
        %v1556 = vshll.u32 %v1555, 30
        %v1557 = vsub.s32 %v1553, %v1556
        %vm1558 = vcmp.lt.s32.totalorder %v1557, 0
        %v1559 = vsub.s32 0, %v1557
        %v1560 = vsel %vm1558, %v1559, %v1557
        %v1561 = vclz %v1560
        %v1562 = vsub.s32 %v1561, 2
        %vm1563 = vcmp.gt.s32.totalorder 0, %v1562
        %v1564 = vsel %vm1563, 0, %v1562
        %v1565 = vsub.s32 32, %v1564
        %v1566 = vshll.u32 %v1557, %v1564
        %v1567 = vshrl.u32 %v1549, %v1565
        %v1568 = vor.u32 %v1566, %v1567
        %v1569 = vsub.s32 4294967266, %v1564
        %v1570 = vadd.s32 %v1569, 127
        %v1571 = vshll.u32 %v1570, 23
        %v1572 = vor.u32 4788187, %v1571
        %v1573 = vand.u32 2147483647, %v1572
        %v1575 = vcvt.s32.f32 %v1568
        %v1576 = vmul.f32 %v1575, %v1573
        %v1577 = vxor.u32 %v1576, 2147483648
        %v1578 = vsel %vm1495, %v1577, %v1576
        %v1579 = vsub.s32 4, %v1555
        %v1580 = vsel %vm1495, %v1579, %v1555
        %v1581 = vsel %vm1494, %v1491, %v1578
        %v1582 = vsel %vm1494, 0, %v1580
        %v1583 = vcosq.f32.pop %v1581
        %v1584 = vsinq.f32.pop %v1581
        %vm1585 = vweird.f32 %v1491
        %v1586 = vadd.s32 %v1582, 3
        %v1587 = vand.u32 %v1586, 3
        %vm1588 = vcmp.lt.s32.totalorder %v1587, 2
        %vm1589 = vcmp.eq.s32.totalorder %v1587, 0
        %v1590 = vxor.u32 %v1584, 2147483648
        %v1591 = vsel %vm1589, %v1583, %v1590
        %vm1592 = vcmp.eq.s32.totalorder %v1587, 2
        %v1593 = vxor.u32 %v1583, 2147483648
        %v1594 = vsel %vm1592, %v1593, %v1584
        %v1595 = vsel %vm1588, %v1591, %v1594
        %v1596 = vsel %vm1585, nan, %v1595
        %v1597 = vand.u32 2147483647, %v1492
        %vm1598 = vcmp.le.f32.partialorder %v1597, 0.7853982
        %vm1599 = vcmp.lt.s32.totalorder %v1492, 0
        %v1600 = vand.u32 %v1492, 2139095040
        %v1601 = vshrl.u32 %v1600, 23
        %v1602 = vsub.s32 %v1601, 127
        %v1603 = vand.u32 2147483647, %v1492
        %v1604 = vand.u32 %v1603, 8388607
        %v1605 = vor.u32 %v1604, 8388608
        %v1606 = vsub.s32 0, %v1605
        %v1607 = vadd.s32 %v1602, 1
        %vm1608 = vcmp.gt.s32.totalorder %v1607, 0
        %v1609 = vsel %vm1608, %v1607, 0
        %v1610 = vshrl.u32 %v1609, 5
        %v1611 = vand.u32 %v1609, 31
        %v1612 = vsub.s32 32, %v1611
        %v1613 = vshrl.u32 683565275, %v1612
        %v1614 = vshll.u32 683565275, %v1611
        %v1615 = vshrl.u32 2475754826, %v1612
        %v1616 = vor.u32 %v1614, %v1615
        %v1617 = vshll.u32 2475754826, %v1611
        %v1618 = vshrl.u32 2131351028, %v1612
        %v1619 = vor.u32 %v1617, %v1618
        %v1620 = vshll.u32 2131351028, %v1611
        %v1621 = vshrl.u32 2102212464, %v1612
        %v1622 = vor.u32 %v1620, %v1621
        %v1623 = vshll.u32 2102212464, %v1611
        %v1624 = vshrl.u32 920167782, %v1612
        %v1625 = vor.u32 %v1623, %v1624
        %v1626 = vshll.u32 920167782, %v1611
        %v1627 = vshrl.u32 1326507024, %v1612
        %v1628 = vor.u32 %v1626, %v1627
        %vm1629 = vcmp.lt.s32.totalorder %v1610, 1
        %vm1630 = vcmp.lt.s32.totalorder %v1610, 2
        %vm1631 = vcmp.lt.s32.totalorder %v1610, 3
        %vm1632 = vcmp.lt.s32.totalorder %v1610, 4
        %v1633 = vsel %vm1629, %v1613, %v1616
        %v1634 = vsel %vm1632, %v1622, 2102212464
        %v1635 = vsel %vm1631, %v1619, %v1634
        %v1636 = vsel %vm1630, %v1633, %v1635
        %v1637 = vsel %vm1629, %v1616, %v1619
        %v1638 = vsel %vm1632, %v1625, 920167782
        %v1639 = vsel %vm1631, %v1622, %v1638
        %v1640 = vsel %vm1630, %v1637, %v1639
        %v1641 = vsel %vm1629, %v1619, %v1622
        %v1642 = vsel %vm1632, %v1628, 1326507024
        %v1643 = vsel %vm1631, %v1625, %v1642
        %v1644 = vsel %vm1630, %v1641, %v1643
        %v1645 = vshll.u32 %v1605, 8
        %v1646 = vmul.u32.u64.compose %v1645, %v1644
        %v1647 = vextract.low.u32 %v1646
        %v1648 = vextract.high.u32 %v1646
        %v1649 = vmul.u32.u64.compose %v1645, %v1640
        %v1650 = vextract.low.u32 %v1649
        %v1651 = vextract.high.u32 %v1649
        %v1652 = vmul.u32 %v1645, %v1636
        %v1653 = vadd.s32 %v1648, %v1650
        %vm1654 = vc.u32 %v1648, %v1650
        %v1655 = vadd.s32 %v1651, 1
        %v1656 = vsel %vm1654, %v1655, %v1651
        %v1657 = vadd.s32 %v1652, %v1656
        %v1658 = vadd.s32 %v1657, 536870912
        %v1659 = vshrl.u32 %v1658, 30
        %v1660 = vshll.u32 %v1659, 30
        %v1661 = vsub.s32 %v1657, %v1660
        %vm1662 = vcmp.lt.s32.totalorder %v1661, 0
        %v1663 = vsub.s32 0, %v1661
        %v1664 = vsel %vm1662, %v1663, %v1661
        %v1665 = vclz %v1664
        %v1666 = vsub.s32 %v1665, 2
        %vm1667 = vcmp.gt.s32.totalorder 0, %v1666
        %v1668 = vsel %vm1667, 0, %v1666
        %v1669 = vsub.s32 32, %v1668
        %v1670 = vshll.u32 %v1661, %v1668
        %v1671 = vshrl.u32 %v1653, %v1669
        %v1672 = vor.u32 %v1670, %v1671
        %v1673 = vsub.s32 4294967266, %v1668
        %v1674 = vadd.s32 %v1673, 127
        %v1675 = vshll.u32 %v1674, 23
        %v1676 = vor.u32 4788187, %v1675
        %v1677 = vand.u32 2147483647, %v1676
        %v1679 = vcvt.s32.f32 %v1672
        %v1680 = vmul.f32 %v1679, %v1677
        %v1681 = vxor.u32 %v1680, 2147483648
        %v1682 = vsel %vm1599, %v1681, %v1680
        %v1683 = vsub.s32 4, %v1659
        %v1684 = vsel %vm1599, %v1683, %v1659
        %v1685 = vsel %vm1598, %v1492, %v1682
        %v1686 = vsel %vm1598, 0, %v1684
        %v1687 = vcosq.f32.pop %v1685
        %v1688 = vsinq.f32.pop %v1685
        %vm1689 = vweird.f32 %v1492
        %v1690 = vadd.s32 %v1686, 3
        %v1691 = vand.u32 %v1690, 3
        %vm1692 = vcmp.lt.s32.totalorder %v1691, 2
        %vm1693 = vcmp.eq.s32.totalorder %v1691, 0
        %v1694 = vxor.u32 %v1688, 2147483648
        %v1695 = vsel %vm1693, %v1687, %v1694
        %vm1696 = vcmp.eq.s32.totalorder %v1691, 2
        %v1697 = vxor.u32 %v1687, 2147483648
        %v1698 = vsel %vm1696, %v1697, %v1688
        %v1699 = vsel %vm1692, %v1695, %v1698
        %v1700 = vsel %vm1689, nan, %v1699
        %v1701 = vmul.f32 %v1596, %v1596
        %v1702 = vmul.f32 %v1700, %v1700
        %1703 = vset.pattern.permute.xlu0 13
        %1704 = vperm.xlu0 %1703, %v228
        %v1705 = vpop.permute.xlu0 %1704
        %v1707 = vmul.f32 %v1705, %v1701
        %v1708 = vmul.f32 %v1705, %v1702
        %v1709 = vadd.f32 %v1485, %v1707
        %v1710 = vadd.f32 %v1486, %v1708
        %v1711 = vld [vmem:[%s3] sm:$0xff]
        %v1712 = vld [vmem:[%s3 + $0x8] sm:$0xff]
        %v1713 = vld [vmem:[%s4] sm:$0xff]
        %v1714 = vld [vmem:[%s4 + $0x8] sm:$0xff]
        %v1715 = vld [vmem:[%s4 + $0x10] sm:$0xff]
        %v1716 = vld [vmem:[%s4 + $0x18] sm:$0xff]
        %v1717 = vld [vmem:[%s4 + $0x20] sm:$0xff]
        %v1718 = vld [vmem:[%s4 + $0x28] sm:$0xff]
        %v1719 = vld [vmem:[%s4 + $0x30] sm:$0xff]
        %v1720 = vld [vmem:[%s4 + $0x38] sm:$0xff]
        %v1721 = vld [vmem:[%s4 + $0x40] sm:$0xff]
        %v1722 = vld [vmem:[%s4 + $0x48] sm:$0xff]
        %v1723 = vld [vmem:[%s4 + $0x50] sm:$0xff]
        %v1724 = vld [vmem:[%s4 + $0x58] sm:$0xff]
        %v1725 = vld [vmem:[%s4 + $0x60] sm:$0xff]
        %v1726 = vld [vmem:[%s4 + $0x68] sm:$0xff]
        %v1727 = vld [vmem:[%s4 + $0x70] sm:$0xff]
        %v1728 = vld [vmem:[%s4 + $0x78] sm:$0xff]
        %v1729 = vld [vmem:[%s4 + $0x80] sm:$0xff]
        %v1730 = vld [vmem:[%s4 + $0x88] sm:$0xff]
        %v1731 = vld [vmem:[%s4 + $0x90] sm:$0xff]
        %v1732 = vld [vmem:[%s4 + $0x98] sm:$0xff]
        %v1733 = vld [vmem:[%s4 + $0xa0] sm:$0xff]
        %v1734 = vld [vmem:[%s4 + $0xa8] sm:$0xff]
        %v1735 = vld [vmem:[%s4 + $0xb0] sm:$0xff]
        %v1736 = vld [vmem:[%s4 + $0xb8] sm:$0xff]
        %v1737 = vld [vmem:[%s4 + $0xc0] sm:$0xff]
        %v1738 = vld [vmem:[%s4 + $0xc8] sm:$0xff]
        %v1739 = vld [vmem:[%s4 + $0xd0] sm:$0xff]
        %v1740 = vld [vmem:[%s4 + $0xd8] sm:$0xff]
        %v1741 = vld [vmem:[%s4 + $0xe0] sm:$0xff]
        %v1742 = vld [vmem:[%s4 + $0xe8] sm:$0xff]
        %v1743 = vld [vmem:[%s4 + $0xf0] sm:$0xff]
        %v1744 = vld [vmem:[%s4 + $0xf8] sm:$0xff]
        %v1745 = vld [vmem:[%s4 + $0x100] sm:$0xff]
        %v1746 = vld [vmem:[%s4 + $0x108] sm:$0xff]
        %v1747 = vld [vmem:[%s4 + $0x110] sm:$0xff]
        %v1748 = vld [vmem:[%s4 + $0x118] sm:$0xff]
        %v1749 = vld [vmem:[%s4 + $0x120] sm:$0xff]
        %v1750 = vld [vmem:[%s4 + $0x128] sm:$0xff]
        %v1751 = vld [vmem:[%s4 + $0x130] sm:$0xff]
        %v1752 = vld [vmem:[%s4 + $0x138] sm:$0xff]
        %v1753 = vld [vmem:[%s4 + $0x140] sm:$0xff]
        %v1754 = vld [vmem:[%s4 + $0x148] sm:$0xff]
        %v1755 = vld [vmem:[%s4 + $0x150] sm:$0xff]
        %v1756 = vld [vmem:[%s4 + $0x158] sm:$0xff]
        %v1757 = vld [vmem:[%s4 + $0x160] sm:$0xff]
        %v1758 = vld [vmem:[%s4 + $0x168] sm:$0xff]
        %v1759 = vld [vmem:[%s4 + $0x170] sm:$0xff]
        %v1760 = vld [vmem:[%s4 + $0x178] sm:$0xff]
        %v1761 = vld [vmem:[%s4 + $0x180] sm:$0xff]
        %v1762 = vld [vmem:[%s4 + $0x188] sm:$0xff]
        %v1763 = vld [vmem:[%s4 + $0x190] sm:$0xff]
        %v1764 = vld [vmem:[%s4 + $0x198] sm:$0xff]
        %v1765 = vld [vmem:[%s4 + $0x1a0] sm:$0xff]
        %v1766 = vld [vmem:[%s4 + $0x1a8] sm:$0xff]
        %v1767 = vld [vmem:[%s4 + $0x1b0] sm:$0xff]
        %v1768 = vld [vmem:[%s4 + $0x1b8] sm:$0xff]
        %v1769 = vld [vmem:[%s4 + $0x1c0] sm:$0xff]
        %v1770 = vld [vmem:[%s4 + $0x1c8] sm:$0xff]
        %v1771 = vld [vmem:[%s4 + $0x1d0] sm:$0xff]
        %v1772 = vld [vmem:[%s4 + $0x1d8] sm:$0xff]
        %v1773 = vld [vmem:[%s4 + $0x1e0] sm:$0xff]
        %v1774 = vld [vmem:[%s4 + $0x1e8] sm:$0xff]
        %v1775 = vld [vmem:[%s4 + $0x1f0] sm:$0xff]
        %v1776 = vld [vmem:[%s4 + $0x1f8] sm:$0xff]
        %1777 = vmatprep.subr.mxu0 %v1744
        %1778 = vmatpush1.msra.mxu0 %v1743
        %1779 = vmatprep.subr.mxu0 %v1742
        %1780 = vmatpush1.msra.mxu0 %v1741
        %1781 = vmatprep.subr.mxu0 %v1740
        %1782 = vmatpush1.msra.mxu0 %v1739
        %1783 = vmatprep.subr.mxu0 %v1738
        %1784 = vmatpush1.msra.mxu0 %v1737
        %1785 = vmatprep.subr.mxu0 %v1736
        %1786 = vmatpush1.msra.mxu0 %v1735
        %1787 = vmatprep.subr.mxu0 %v1734
        %1788 = vmatpush1.msra.mxu0 %v1733
        %1789 = vmatprep.subr.mxu0 %v1732
        %1790 = vmatpush1.msra.mxu0 %v1731
        %1791 = vmatprep.subr.mxu0 %v1730
        %1792 = vmatpush1.msra.mxu0 %v1729
        %1793 = vmatprep.subr.mxu0 %v1728
        %1794 = vmatpush1.msra.mxu0 %v1727
        %1795 = vmatprep.subr.mxu0 %v1726
        %1796 = vmatpush1.msra.mxu0 %v1725
        %1797 = vmatprep.subr.mxu0 %v1724
        %1798 = vmatpush1.msra.mxu0 %v1723
        %1799 = vmatprep.subr.mxu0 %v1722
        %1800 = vmatpush1.msra.mxu0 %v1721
        %1801 = vmatprep.subr.mxu0 %v1720
        %1802 = vmatpush1.msra.mxu0 %v1719
        %1803 = vmatprep.subr.mxu0 %v1718
        %1804 = vmatpush1.msra.mxu0 %v1717
        %1805 = vmatprep.subr.mxu0 %v1716
        %1806 = vmatpush1.msra.mxu0 %v1715
        %1807 = vmatprep.subr.mxu0 %v1714
        %1808 = vmatpush1.msra.mxu0 %v1713
        %1809 = vmatprep.subr.mxu0 %v1776
        %1810 = vmatpush2.msra.mxu0 %v1775
        %1811 = vmatprep.subr.mxu0 %v1774
        %1812 = vmatpush2.msra.mxu0 %v1773
        %1813 = vmatprep.subr.mxu0 %v1772
        %1814 = vmatpush2.msra.mxu0 %v1771
        %1815 = vmatprep.subr.mxu0 %v1770
        %1816 = vmatpush2.msra.mxu0 %v1769
        %1817 = vmatprep.subr.mxu0 %v1768
        %1818 = vmatpush2.msra.mxu0 %v1767
        %1819 = vmatprep.subr.mxu0 %v1766
        %1820 = vmatpush2.msra.mxu0 %v1765
        %1821 = vmatprep.subr.mxu0 %v1764
        %1822 = vmatpush2.msra.mxu0 %v1763
        %1823 = vmatprep.subr.mxu0 %v1762
        %1824 = vmatpush2.msra.mxu0 %v1761
        %1825 = vmatprep.subr.mxu0 %v1760
        %1826 = vmatpush2.msra.mxu0 %v1759
        %1827 = vmatprep.subr.mxu0 %v1758
        %1828 = vmatpush2.msra.mxu0 %v1757
        %1829 = vmatprep.subr.mxu0 %v1756
        %1830 = vmatpush2.msra.mxu0 %v1755
        %1831 = vmatprep.subr.mxu0 %v1754
        %1832 = vmatpush2.msra.mxu0 %v1753
        %1833 = vmatprep.subr.mxu0 %v1752
        %1834 = vmatpush2.msra.mxu0 %v1751
        %1835 = vmatprep.subr.mxu0 %v1750
        %1836 = vmatpush2.msra.mxu0 %v1749
        %1837 = vmatprep.subr.mxu0 %v1748
        %1838 = vmatpush2.msra.mxu0 %v1747
        %1839 = vmatprep.subr.mxu0 %v1746
        %1840 = vmatpush2.msra.mxu0 %v1745
        %1841 = vmatprep.mubr.f32.mxu0 %v1710
        %1842 = vmatmul.mubr.f32.gmra.mxu0 %v1709
        %v1843 = vpop.f32.mrf.mxu0
        %v1844 = vadd.f32 0.0, %v1843
        %v1845 = vpop.f32.mrf.mxu0
        %v1846 = vadd.f32 0.0, %v1845
        %1847 = vdwg.mxu0
        %1849 = vset.pattern.permute.xlu0 16
        %1850 = vperm.xlu0 %1849, %v1711
        %v1851 = vpop.permute.xlu0 %1850
        %1854 = vset.pattern.permute.xlu0 16
        %1855 = vperm.xlu0 %1854, %v1712
        %v1856 = vpop.permute.xlu0 %1855
        %vm1858 = vcmask 130048
        %v1859 = vsel %vm1858, %v1711, 0
        %v1861 = vsel %vm1858, %v1712, 0
        %1863 = vmatprep.subr.mxu0 0.0
        %1864 = vmatpush1.msra.mxu0 0.0
        %1865 = vmatprep.subr.mxu0 0.0
        %1866 = vmatpush1.msra.mxu0 0.0
        %1867 = vmatprep.subr.mxu0 0.0
        %1868 = vmatpush1.msra.mxu0 0.0
        %1869 = vmatprep.subr.mxu0 0.0
        %1870 = vmatpush1.msra.mxu0 0.0
        %1871 = vmatprep.subr.mxu0 0.0
        %1872 = vmatpush1.msra.mxu0 0.0
        %1873 = vmatprep.subr.mxu0 0.0
        %1874 = vmatpush1.msra.mxu0 0.0
        %1875 = vmatprep.subr.mxu0 0.0
        %1876 = vmatpush1.msra.mxu0 0.0
        %1877 = vmatprep.subr.mxu0 0.0
        %1878 = vmatpush1.msra.mxu0 0.0
        %1879 = vmatprep.subr.mxu0 0.0
        %1880 = vmatpush1.msra.mxu0 0.0
        %1881 = vmatprep.subr.mxu0 0.0
        %1882 = vmatpush1.msra.mxu0 0.0
        %1883 = vmatprep.subr.mxu0 0.0
        %1884 = vmatpush1.msra.mxu0 0.0
        %1885 = vmatprep.subr.mxu0 0.0
        %1886 = vmatpush1.msra.mxu0 0.0
        %1887 = vmatprep.subr.mxu0 0.0
        %1888 = vmatpush1.msra.mxu0 0.0
        %1889 = vmatprep.subr.mxu0 0.0
        %1890 = vmatpush1.msra.mxu0 0.0
        %1891 = vmatprep.subr.mxu0 0.0
        %1892 = vmatpush1.msra.mxu0 %v1846
        %1893 = vmatprep.subr.mxu0 0.0
        %1894 = vmatpush1.msra.mxu0 %v1844
        %1895 = vmatprep.subr.mxu0 0.0
        %1896 = vmatpush2.msra.mxu0 0.0
        %1897 = vmatprep.subr.mxu0 0.0
        %1898 = vmatpush2.msra.mxu0 0.0
        %1899 = vmatprep.subr.mxu0 0.0
        %1900 = vmatpush2.msra.mxu0 0.0
        %1901 = vmatprep.subr.mxu0 0.0
        %1902 = vmatpush2.msra.mxu0 0.0
        %1903 = vmatprep.subr.mxu0 0.0
        %1904 = vmatpush2.msra.mxu0 0.0
        %1905 = vmatprep.subr.mxu0 0.0
        %1906 = vmatpush2.msra.mxu0 0.0
        %1907 = vmatprep.subr.mxu0 0.0
        %1908 = vmatpush2.msra.mxu0 0.0
        %1909 = vmatprep.subr.mxu0 0.0
        %1910 = vmatpush2.msra.mxu0 0.0
        %1911 = vmatprep.subr.mxu0 0.0
        %1912 = vmatpush2.msra.mxu0 0.0
        %1913 = vmatprep.subr.mxu0 0.0
        %1914 = vmatpush2.msra.mxu0 0.0
        %1915 = vmatprep.subr.mxu0 0.0
        %1916 = vmatpush2.msra.mxu0 0.0
        %1917 = vmatprep.subr.mxu0 0.0
        %1918 = vmatpush2.msra.mxu0 0.0
        %1919 = vmatprep.subr.mxu0 0.0
        %1920 = vmatpush2.msra.mxu0 0.0
        %1921 = vmatprep.subr.mxu0 0.0
        %1922 = vmatpush2.msra.mxu0 0.0
        %1923 = vmatprep.subr.mxu0 0.0
        %1924 = vmatpush2.msra.mxu0 0.0
        %1925 = vmatprep.subr.mxu0 0.0
        %1926 = vmatpush2.msra.mxu0 0.0
        %1927 = vmatprep.mubr.f32.mxu0 0.0
        %1928 = vmatmul.mubr.f32.gmra.mxu0 %v1859
        %v1929 = vpop.f32.mrf.mxu0
        %v1930 = vadd.f32 %v1851, %v1929
        %v1931 = vpop.f32.mrf.mxu0
        %1932 = vmatprep.mubr.f32.mxu0 0.0
        %1933 = vmatmul.mubr.f32.gmra.mxu0 %v1861
        %v1934 = vpop.f32.mrf.mxu0
        %v1935 = vadd.f32 %v1856, %v1934
        %v1936 = vpop.f32.mrf.mxu0
        %1937 = vdwg.mxu0
        %1938 = vst [vmem:[%s217] sm:$0xff] %v1930
        %1939 = vst [vmem:[%s217 + $0x8] sm:$0xff] %v1935
        %s1940 = sand.u32 %s137, 1
        %s1941 = scalar_lea.sflag [#allocation3], %s1940
        %s1942 = sand.u32 %s137, 1
        %s1943 = smul.addr %s1942, 16
        %s1944 = scalar_lea.vmem [#allocation2], %s1943
        // Predicated region
        $region41: #{ss_encoder_block.1} parent=39 // pred_check
          %p1945 = pneg %p147
        $region42: #{ss_encoder_block.1} parent=39 // pred_check_branch
          %1947 = sbr.rel (%p1945) target = $region44
        $region43: #{ss_encoder_block.1} parent=39 // pred_region
          %s1949 = ssub.s32 256, 256
          %1950 = vsyncadd %s1941, %s1949
          %s1951 = smul.addr %s19, 2
          %s1952 = smul.addr %s1951, 128
          %s1953 = scalar_lea.hbm %s5, %s1952
          %s1954 = sshll.u32 %s1944, 4
          %s1955 = int_to_ptr.vmem [resolvable:$true] %s1954
          %1960 = dma.vmem_to_hbm [thread:$0]  %s1955, 256, %s1953, %s1941, 128, 128, 8
        $region44: #{ss_encoder_block.1} parent=39 // pred_fallthru
          _
      $region40: #{ss_encoder_block.1} parent=5 // pred_fallthru
        _
      %p1961 = scmp.le.s32.totalorder 2, %s14
      // Predicated region
      $region45: #{ss_encoder_block.1} parent=5 // pred_check
        %p1962 = pneg %p1961
      $region46: #{ss_encoder_block.1} parent=5 // pred_check_branch
        %1964 = sbr.rel (%p1962) target = $region48
      $region47: #{ss_encoder_block.1} parent=5 // pred_region
        %s1965 = ssub.s32 %s14, 2
        // Predicated region
        $region49: #{ss_encoder_block.1} parent=47 // pred_check
          %p1966 = pneg %p153
        $region50: #{ss_encoder_block.1} parent=47 // pred_check_branch
          %1968 = sbr.rel (%p1966) target = $region52
        $region51: #{ss_encoder_block.1} parent=47 // pred_region
          %s1969 = sand.u32 %s138, 1
          %s1970 = scalar_lea.sflag [#allocation3], %s1969
          %s1971 = sand.u32 %s138, 1
          %s1972 = smul.addr %s1971, 16
          %s1973 = scalar_lea.vmem [#allocation2], %s1972
          %1974 = dma.done %s1970, 256
        $region52: #{ss_encoder_block.1} parent=47 // pred_fallthru
          _
      $region48: #{ss_encoder_block.1} parent=5 // pred_fallthru
        _
    $region6: #{ss_encoder_block.1} parent=1 // loop_footer
      %s18 = sadd.s32 1, %s14
    $region7: #{ss_encoder_block.1} parent=1 // loop_footer_branch
      %13 = sbr.rel target = $region3
    $region8: #{ss_encoder_block.1} parent=1 // loop_exit
      _
    %1975 = vsyncpa [#allocation3], 1
    %s1976 = scalar_lea.sflag [#allocation3], 1
    %1977 = vsyncpa %s1976, 1

</llo_original>
